<compile_context>
chip_gen: v7x
topology: tpu7x:2x2x1
jax: 0.10.0
libtpu: 0.0.40
codegen_flags: <defaults>
</compile_context>

<pallas_src>
import jax
import jax.numpy as jnp
from jax.experimental import pallas as pl
from jax.experimental.pallas import tpu as pltpu


def _vmem_spec():
    return pl.BlockSpec(memory_space=pltpu.MemorySpace.VMEM)


# ------------------------------ Pallas kernels ------------------------------

def conv1_pool_relu_kernel(cols_ref, w_ref, b_ref, out_ref):
    """conv1 (single matmul, batch folded into lanes) -> 2x2 max-pool -> ReLU.

    cols: (F1, 4*B*G1) bf16, lanes ordered [pool member t | batch b | padded spatial]
    w:    (C1, F1)     bf16
    b:    (C1, 1)      f32
    out:  (C1, B*G1)   bf16, lanes = b*G1 + (ph*Wp + pw)  (128-aligned, lane-dense)
    """
    n = out_ref.shape[-1]                                       # B*G1
    y = jnp.dot(w_ref[...], cols_ref[...],
                preferred_element_type=jnp.float32)             # (C1, 4*n)
    m = jnp.maximum(jnp.maximum(y[:, 0:n], y[:, n:2 * n]),
                    jnp.maximum(y[:, 2 * n:3 * n], y[:, 3 * n:4 * n]))
    out_ref[...] = jnp.maximum(m + b_ref[...], 0.0).astype(out_ref.dtype)


def conv2_mlp_kernel(cols_ref, wc_ref, bc_ref, w1_ref, b1_ref, w2_ref, b2_ref,
                     out_ref, wide_ref):
    """Fused tail: conv2 -> 2x2 max-pool -> ReLU -> fc1 -> ReLU -> fc2 -> log_softmax.

    cols: (4*S*B, F2) bf16, rows ordered (pool member t, pooled pos s, batch b)
    wc:   (F2, C2) bf16;  bc: (1, C2) f32
    w1:   (S*C2, H1) bf16, rows ordered s*C2 + c (torch flatten folded in)
    b1:   (1, H1) f32;  w2: (H1, ncls) bf16;  b2: (1, ncls) f32
    out:  (B, ncls) f32 log-probabilities
    wide: (B, S*C2) f32 VMEM scratch used for the (s,b,c)->(b, s*C2+c) relayout
    """
    nb = out_ref.shape[0]                       # B
    nc2 = wc_ref.shape[1]                       # 20
    ns = wide_ref.shape[1] // nc2               # 25
    grp = ns * nb                               # 50

    # conv2 as ONE matmul over all pool members / positions / batch rows.
    z = jnp.dot(cols_ref[...], wc_ref[...],
                preferred_element_type=jnp.float32)             # (4*grp, C2)
    # 2x2 max-pool = 3 maxes over four contiguous row blocks; bias after max; ReLU.
    m = jnp.maximum(jnp.maximum(z[0:grp], z[grp:2 * grp]),
                    jnp.maximum(z[2 * grp:3 * grp], z[3 * grp:4 * grp]))
    act = jnp.maximum(m + bc_ref[...], 0.0)                     # (grp, C2), rows (s, b)

    # Relayout (s, b, c) -> (b, s*C2 + c): 25 independent masked stores (~4 KB total),
    # no serial accumulation chain, no per-position matmuls.
    for s in range(ns):
        wide_ref[:, s * nc2:(s + 1) * nc2] = act[s * nb:(s + 1) * nb, :]

    wide = wide_ref[...].astype(jnp.bfloat16)                   # (B, 500)
    h = jnp.dot(wide, w1_ref[...], preferred_element_type=jnp.float32) + b1_ref[...]
    h = jnp.maximum(h, 0.0).astype(jnp.bfloat16)                # fc1 + ReLU
    # TODO(synk): nn.Dropout2d / F.dropout are identity here (inference); no RNG mask.
    logits = jnp.dot(h, w2_ref[...],
                     preferred_element_type=jnp.float32) + b2_ref[...]
    mx = jnp.max(logits, axis=-1, keepdims=True)
    sh = logits - mx
    out_ref[...] = sh - jnp.log(jnp.sum(jnp.exp(sh), axis=-1, keepdims=True))


# --------------------------------- JAX glue ---------------------------------

def _im2col_pool_groups(x, K):
    """NCHW -> (B, C*K*K, 4, Hp*Wp): valid-conv patches grouped by 2x2 pool window.

    Group t = di*2 + dj addresses conv-output position (2*ph+di, 2*pw+dj); feature
    order is channel-major (c, kh, kw), matching torch weight.reshape(Cout, -1).
    """
    B, C, H, W = x.shape
    Ho, Wo = H - K + 1, W - K + 1
    Hp, Wp = Ho // 2, Wo // 2
    pats = jnp.stack([x[:, :, ki:ki + Ho, kj:kj + Wo]
                      for ki in range(K) for kj in range(K)], axis=2)   # (B,C,K*K,Ho,Wo)
    pats = pats.reshape(B, C * K * K, Ho, Wo)
    pats = pats.reshape(B, C * K * K, Hp, 2, Wp, 2)
    pats = pats.transpose(0, 1, 3, 5, 2, 4)                             # (B,F,di,dj,Hp,Wp)
    return pats.reshape(B, C * K * K, 4, Hp * Wp)


def net_forward(x, params):
    """Forward pass of Net. x: (B, in_channel, 32, 32) float32 NCHW."""
    B, Cin, H, W = x.shape
    K = 5

    # ----------------- conv1 + pool + ReLU (kernel 1, no grid) -----------------
    Hp, Wp = (H - K + 1) // 2, (W - K + 1) // 2              # 14, 14
    s1 = Hp * Wp                                             # 196
    g1 = ((s1 + 127) // 128) * 128                           # 256 (lane-aligned)
    F1 = Cin * K * K

    p1 = _im2col_pool_groups(x.astype(jnp.bfloat16), K)      # (B, F1, 4, 196) bf16
    p1 = jnp.pad(p1, ((0, 0), (0, 0), (0, 0), (0, g1 - s1)))
    cols1 = p1.transpose(1, 2, 0, 3).reshape(F1, 4 * B * g1)  # cols ordered (t, b, s)

    c1 = params['conv1_w'].shape[0]                          # 10
    w1c = params['conv1_w'].reshape(c1, F1).astype(jnp.bfloat16)
    b1c = params['conv1_b'].reshape(c1, 1).astype(jnp.float32)

    a1p = pl.pallas_call(
        conv1_pool_relu_kernel,
        out_shape=jax.ShapeDtypeStruct((c1, B * g1), jnp.bfloat16),
        in_specs=[_vmem_spec()] * 3,
        out_specs=_vmem_spec(),
    )(cols1, w1c, b1c)

    # padded lanes [s1:g1] hold relu(bias) garbage -> sliced off here.
    a1 = (a1p.reshape(c1, B, g1)[:, :, :s1]
             .reshape(c1, B, Hp, Wp).transpose(1, 0, 2, 3))   # (B, 10, 14, 14) bf16

    # ----- conv2 + pool + ReLU + fc1 + ReLU + fc2 + log_softmax (kernel 2) -----
    Hq, Wq = (Hp - K + 1) // 2, (Wp - K + 1) // 2            # 5, 5
    s2 = Hq * Wq                                             # 25
    F2 = c1 * K * K                                          # 250
    c2 = params['conv2_w'].shape[0]                          # 20

    p2 = _im2col_pool_groups(a1, K)                          # (B, F2, 4, 25) bf16
    cols2 = p2.transpose(2, 3, 0, 1).reshape(4 * s2 * B, F2)  # rows ordered (t, s, b)

    # Weight layouts prepared once here (nothing per kernel).
    wc = params['conv2_w'].reshape(c2, F2).T.astype(jnp.bfloat16)        # (250, 20)
    bc = params['conv2_b'].reshape(1, c2).astype(jnp.float32)
    nh = params['fc1_w'].shape[0]                                        # 40
    # torch flatten column = c*25 + s; our lanes are s*20 + c -> permute rows.
    w1p = (params['fc1_w'].reshape(nh, c2, s2).transpose(2, 1, 0)
                          .reshape(s2 * c2, nh).astype(jnp.bfloat16))    # (500, 40)
    b1 = params['fc1_b'].reshape(1, nh).astype(jnp.float32)
    ncls = params['fc2_w'].shape[0]
    w2t = params['fc2_w'].T.astype(jnp.bfloat16)                         # (40, ncls)
    b2 = params['fc2_b'].reshape(1, ncls).astype(jnp.float32)

    return pl.pallas_call(
        conv2_mlp_kernel,
        out_shape=jax.ShapeDtypeStruct((B, ncls), jnp.float32),
        in_specs=[_vmem_spec()] * 7,
        out_specs=_vmem_spec(),
        scratch_shapes=[pltpu.VMEM((B, s2 * c2), jnp.float32)],
    )(cols2, wc, bc, w1p, b1, w2t, b2)


def init_params(key, in_channel, num_classes):
    ks = jax.random.split(key, 8)
    u = lambda k, shape, s=0.1: jax.random.uniform(k, shape, jnp.float32, -s, s)
    return dict(
        conv1_w=u(ks[0], (10, in_channel, 5, 5)),
        conv1_b=u(ks[1], (10,)),
        conv2_w=u(ks[2], (20, 10, 5, 5)),
        conv2_b=u(ks[3], (20,)),
        fc1_w=u(ks[4], (40, 500)),
        fc1_b=u(ks[5], (40,)),
        fc2_w=u(ks[6], (num_classes, 40)),
        fc2_b=u(ks[7], (num_classes,)),
    )


if __name__ == "__main__":
    in_channels, num_classes = 4, 10
    B, H, W = 2, 32, 32   # 32x32 spatial so the flatten is exactly 500 = 20*5*5

    key = jax.random.PRNGKey(0)
    kx, kp = jax.random.split(key)
    x = jax.random.normal(kx, (B, in_channels, H, W), jnp.float32)
    params = init_params(kp, in_channels, num_classes)

    fwd = jax.jit(net_forward)
    out = jax.block_until_ready(fwd(x, params))

    assert out.shape == (B, num_classes)
    assert bool(jnp.all(jnp.isfinite(out)))
    # log_softmax rows must normalize: sum(exp(row)) == 1
    assert bool(jnp.all(jnp.abs(jnp.sum(jnp.exp(out), axis=1) - 1.0) < 1e-3))
    print("KERNEL_OK")
</pallas_src>

<mosaic_0001>
module attributes {stable_mosaic.version = 11 : i64} {
  func.func @conv1_pool_relu_kernel(%arg0: memref<100x2048xbf16, #tpu.memory_space<vmem>>, %arg1: memref<10x100xbf16, #tpu.memory_space<vmem>>, %arg2: memref<10x1xf32, #tpu.memory_space<vmem>>, %arg3: memref<10x512xbf16, #tpu.memory_space<vmem>>) attributes {dimension_semantics = [], scalar_prefetch = 0 : i64, scratch_operands = 0 : i64, tpu.core_type = #tpu.core_type<tc>} {
    %c0 = arith.constant 0 : index
    %c0_0 = arith.constant 0 : index
    %0 = vector.load %arg1[%c0, %c0_0] : memref<10x100xbf16, #tpu.memory_space<vmem>>, vector<10x100xbf16>
    %c0_1 = arith.constant 0 : index
    %c0_2 = arith.constant 0 : index
    %1 = vector.load %arg0[%c0_1, %c0_2] : memref<100x2048xbf16, #tpu.memory_space<vmem>>, vector<100x2048xbf16>
    %cst = arith.constant dense<0.000000e+00> : vector<10x2048xf32>
    %2 = tpu.matmul %0, %1, %cst {dimension_numbers = #tpu.dot_dimension_numbers<[1], [0], [0], [1], [0, 0, 1, 1], [], []>} : vector<10x100xbf16>, vector<100x2048xbf16>, vector<10x2048xf32> -> vector<10x2048xf32>
    %3 = vector.extract_strided_slice %2 {offsets = [0, 0], sizes = [10, 512], strides = [1, 1]} : vector<10x2048xf32> to vector<10x512xf32>
    %4 = vector.extract_strided_slice %2 {offsets = [0, 512], sizes = [10, 512], strides = [1, 1]} : vector<10x2048xf32> to vector<10x512xf32>
    %5 = arith.maximumf %3, %4 : vector<10x512xf32>
    %6 = vector.extract_strided_slice %2 {offsets = [0, 1024], sizes = [10, 512], strides = [1, 1]} : vector<10x2048xf32> to vector<10x512xf32>
    %7 = vector.extract_strided_slice %2 {offsets = [0, 1536], sizes = [10, 512], strides = [1, 1]} : vector<10x2048xf32> to vector<10x512xf32>
    %8 = arith.maximumf %6, %7 : vector<10x512xf32>
    %9 = arith.maximumf %5, %8 : vector<10x512xf32>
    %c0_3 = arith.constant 0 : index
    %c0_4 = arith.constant 0 : index
    %10 = vector.load %arg2[%c0_3, %c0_4] : memref<10x1xf32, #tpu.memory_space<vmem>>, vector<10x1xf32>
    %11 = vector.broadcast %10 : vector<10x1xf32> to vector<10x512xf32>
    %12 = arith.addf %9, %11 : vector<10x512xf32>
    %cst_5 = arith.constant 0.000000e+00 : f32
    %13 = vector.broadcast %cst_5 : f32 to vector<10x512xf32>
    %14 = arith.maximumf %12, %13 : vector<10x512xf32>
    %15 = arith.truncf %14 : vector<10x512xf32> to vector<10x512xbf16>
    %c0_6 = arith.constant 0 : index
    %c0_7 = arith.constant 0 : index
    %16 = vector.load %arg3[%c0_6, %c0_7] : memref<10x512xbf16, #tpu.memory_space<vmem>>, vector<10x512xbf16>
    tpu.vector_store %arg3[%c0_6, %c0_7], %15 {strides = array<i32>} : memref<10x512xbf16, #tpu.memory_space<vmem>>, vector<10x512xbf16>,
    return
  }
}

module attributes {stable_mosaic.version = 11 : i64} {
  func.func @conv2_mlp_kernel(%arg0: memref<200x250xbf16, #tpu.memory_space<vmem>>, %arg1: memref<250x20xbf16, #tpu.memory_space<vmem>>, %arg2: memref<1x20xf32, #tpu.memory_space<vmem>>, %arg3: memref<500x40xbf16, #tpu.memory_space<vmem>>, %arg4: memref<1x40xf32, #tpu.memory_space<vmem>>, %arg5: memref<40x10xbf16, #tpu.memory_space<vmem>>, %arg6: memref<1x10xf32, #tpu.memory_space<vmem>>, %arg7: memref<2x10xf32, #tpu.memory_space<vmem>>, %arg8: memref<2x500xf32, #tpu.memory_space<vmem>>) attributes {dimension_semantics = [], scalar_prefetch = 0 : i64, scratch_operands = 1 : i64, tpu.core_type = #tpu.core_type<tc>} {
    %c0 = arith.constant 0 : index
    %c0_0 = arith.constant 0 : index
    %0 = vector.load %arg0[%c0, %c0_0] : memref<200x250xbf16, #tpu.memory_space<vmem>>, vector<200x250xbf16>
    %c0_1 = arith.constant 0 : index
    %c0_2 = arith.constant 0 : index
    %1 = vector.load %arg1[%c0_1, %c0_2] : memref<250x20xbf16, #tpu.memory_space<vmem>>, vector<250x20xbf16>
    %cst = arith.constant dense<0.000000e+00> : vector<200x20xf32>
    %2 = tpu.matmul %0, %1, %cst {dimension_numbers = #tpu.dot_dimension_numbers<[1], [0], [0], [1], [0, 0, 1, 1], [], []>} : vector<200x250xbf16>, vector<250x20xbf16>, vector<200x20xf32> -> vector<200x20xf32>
    %3 = vector.extract_strided_slice %2 {offsets = [0, 0], sizes = [50, 20], strides = [1, 1]} : vector<200x20xf32> to vector<50x20xf32>
    %4 = vector.extract_strided_slice %2 {offsets = [50, 0], sizes = [50, 20], strides = [1, 1]} : vector<200x20xf32> to vector<50x20xf32>
    %5 = arith.maximumf %3, %4 : vector<50x20xf32>
    %6 = vector.extract_strided_slice %2 {offsets = [100, 0], sizes = [50, 20], strides = [1, 1]} : vector<200x20xf32> to vector<50x20xf32>
    %7 = vector.extract_strided_slice %2 {offsets = [150, 0], sizes = [50, 20], strides = [1, 1]} : vector<200x20xf32> to vector<50x20xf32>
    %8 = arith.maximumf %6, %7 : vector<50x20xf32>
    %9 = arith.maximumf %5, %8 : vector<50x20xf32>
    %c0_3 = arith.constant 0 : index
    %c0_4 = arith.constant 0 : index
    %10 = vector.load %arg2[%c0_3, %c0_4] : memref<1x20xf32, #tpu.memory_space<vmem>>, vector<1x20xf32>
    %11 = vector.broadcast %10 : vector<1x20xf32> to vector<50x20xf32>
    %12 = arith.addf %9, %11 : vector<50x20xf32>
    %cst_5 = arith.constant 0.000000e+00 : f32
    %13 = vector.broadcast %cst_5 : f32 to vector<50x20xf32>
    %14 = arith.maximumf %12, %13 : vector<50x20xf32>
    %15 = vector.extract_strided_slice %14 {offsets = [0, 0], sizes = [2, 20], strides = [1, 1]} : vector<50x20xf32> to vector<2x20xf32>
    %c0_6 = arith.constant 0 : index
    %c0_7 = arith.constant 0 : index
    %16 = vector.load %arg8[%c0_6, %c0_7] : memref<2x500xf32, #tpu.memory_space<vmem>>, vector<2x20xf32>
    tpu.vector_store %arg8[%c0_6, %c0_7], %15 {strides = array<i32>} : memref<2x500xf32, #tpu.memory_space<vmem>>, vector<2x20xf32>,
    %17 = vector.extract_strided_slice %14 {offsets = [2, 0], sizes = [2, 20], strides = [1, 1]} : vector<50x20xf32> to vector<2x20xf32>
    %c0_8 = arith.constant 0 : index
    %c20 = arith.constant 20 : index
    %18 = vector.load %arg8[%c0_8, %c20] : memref<2x500xf32, #tpu.memory_space<vmem>>, vector<2x20xf32>
    tpu.vector_store %arg8[%c0_8, %c20], %17 {strides = array<i32>} : memref<2x500xf32, #tpu.memory_space<vmem>>, vector<2x20xf32>,
    %19 = vector.extract_strided_slice %14 {offsets = [4, 0], sizes = [2, 20], strides = [1, 1]} : vector<50x20xf32> to vector<2x20xf32>
    %c0_9 = arith.constant 0 : index
    %c40 = arith.constant 40 : index
    %20 = vector.load %arg8[%c0_9, %c40] : memref<2x500xf32, #tpu.memory_space<vmem>>, vector<2x20xf32>
    tpu.vector_store %arg8[%c0_9, %c40], %19 {strides = array<i32>} : memref<2x500xf32, #tpu.memory_space<vmem>>, vector<2x20xf32>,
    %21 = vector.extract_strided_slice %14 {offsets = [6, 0], sizes = [2, 20], strides = [1, 1]} : vector<50x20xf32> to vector<2x20xf32>
    %c0_10 = arith.constant 0 : index
    %c60 = arith.constant 60 : index
    %22 = vector.load %arg8[%c0_10, %c60] : memref<2x500xf32, #tpu.memory_space<vmem>>, vector<2x20xf32>
    tpu.vector_store %arg8[%c0_10, %c60], %21 {strides = array<i32>} : memref<2x500xf32, #tpu.memory_space<vmem>>, vector<2x20xf32>,
    %23 = vector.extract_strided_slice %14 {offsets = [8, 0], sizes = [2, 20], strides = [1, 1]} : vector<50x20xf32> to vector<2x20xf32>
    %c0_11 = arith.constant 0 : index
    %c80 = arith.constant 80 : index
    %24 = vector.load %arg8[%c0_11, %c80] : memref<2x500xf32, #tpu.memory_space<vmem>>, vector<2x20xf32>
    tpu.vector_store %arg8[%c0_11, %c80], %23 {strides = array<i32>} : memref<2x500xf32, #tpu.memory_space<vmem>>, vector<2x20xf32>,
    %25 = vector.extract_strided_slice %14 {offsets = [10, 0], sizes = [2, 20], strides = [1, 1]} : vector<50x20xf32> to vector<2x20xf32>
    %c0_12 = arith.constant 0 : index
    %c100 = arith.constant 100 : index
    %26 = vector.load %arg8[%c0_12, %c100] : memref<2x500xf32, #tpu.memory_space<vmem>>, vector<2x20xf32>
    tpu.vector_store %arg8[%c0_12, %c100], %25 {strides = array<i32>} : memref<2x500xf32, #tpu.memory_space<vmem>>, vector<2x20xf32>,
    %27 = vector.extract_strided_slice %14 {offsets = [12, 0], sizes = [2, 20], strides = [1, 1]} : vector<50x20xf32> to vector<2x20xf32>
    %c0_13 = arith.constant 0 : index
    %c120 = arith.constant 120 : index
    %28 = vector.load %arg8[%c0_13, %c120] : memref<2x500xf32, #tpu.memory_space<vmem>>, vector<2x20xf32>
    tpu.vector_store %arg8[%c0_13, %c120], %27 {strides = array<i32>} : memref<2x500xf32, #tpu.memory_space<vmem>>, vector<2x20xf32>,
    %29 = vector.extract_strided_slice %14 {offsets = [14, 0], sizes = [2, 20], strides = [1, 1]} : vector<50x20xf32> to vector<2x20xf32>
    %c0_14 = arith.constant 0 : index
    %c140 = arith.constant 140 : index
    %30 = vector.load %arg8[%c0_14, %c140] : memref<2x500xf32, #tpu.memory_space<vmem>>, vector<2x20xf32>
    tpu.vector_store %arg8[%c0_14, %c140], %29 {strides = array<i32>} : memref<2x500xf32, #tpu.memory_space<vmem>>, vector<2x20xf32>,
    %31 = vector.extract_strided_slice %14 {offsets = [16, 0], sizes = [2, 20], strides = [1, 1]} : vector<50x20xf32> to vector<2x20xf32>
    %c0_15 = arith.constant 0 : index
    %c160 = arith.constant 160 : index
    %32 = vector.load %arg8[%c0_15, %c160] : memref<2x500xf32, #tpu.memory_space<vmem>>, vector<2x20xf32>
    tpu.vector_store %arg8[%c0_15, %c160], %31 {strides = array<i32>} : memref<2x500xf32, #tpu.memory_space<vmem>>, vector<2x20xf32>,
    %33 = vector.extract_strided_slice %14 {offsets = [18, 0], sizes = [2, 20], strides = [1, 1]} : vector<50x20xf32> to vector<2x20xf32>
    %c0_16 = arith.constant 0 : index
    %c180 = arith.constant 180 : index
    %34 = vector.load %arg8[%c0_16, %c180] : memref<2x500xf32, #tpu.memory_space<vmem>>, vector<2x20xf32>
    tpu.vector_store %arg8[%c0_16, %c180], %33 {strides = array<i32>} : memref<2x500xf32, #tpu.memory_space<vmem>>, vector<2x20xf32>,
    %35 = vector.extract_strided_slice %14 {offsets = [20, 0], sizes = [2, 20], strides = [1, 1]} : vector<50x20xf32> to vector<2x20xf32>
    %c0_17 = arith.constant 0 : index
    %c200 = arith.constant 200 : index
    %36 = vector.load %arg8[%c0_17, %c200] : memref<2x500xf32, #tpu.memory_space<vmem>>, vector<2x20xf32>
    tpu.vector_store %arg8[%c0_17, %c200], %35 {strides = array<i32>} : memref<2x500xf32, #tpu.memory_space<vmem>>, vector<2x20xf32>,
    %37 = vector.extract_strided_slice %14 {offsets = [22, 0], sizes = [2, 20], strides = [1, 1]} : vector<50x20xf32> to vector<2x20xf32>
    %c0_18 = arith.constant 0 : index
    %c220 = arith.constant 220 : index
    %38 = vector.load %arg8[%c0_18, %c220] : memref<2x500xf32, #tpu.memory_space<vmem>>, vector<2x20xf32>
    tpu.vector_store %arg8[%c0_18, %c220], %37 {strides = array<i32>} : memref<2x500xf32, #tpu.memory_space<vmem>>, vector<2x20xf32>,
    %39 = vector.extract_strided_slice %14 {offsets = [24, 0], sizes = [2, 20], strides = [1, 1]} : vector<50x20xf32> to vector<2x20xf32>
    %c0_19 = arith.constant 0 : index
    %c240 = arith.constant 240 : index
    %40 = vector.load %arg8[%c0_19, %c240] : memref<2x500xf32, #tpu.memory_space<vmem>>, vector<2x20xf32>
    tpu.vector_store %arg8[%c0_19, %c240], %39 {strides = array<i32>} : memref<2x500xf32, #tpu.memory_space<vmem>>, vector<2x20xf32>,
    %41 = vector.extract_strided_slice %14 {offsets = [26, 0], sizes = [2, 20], strides = [1, 1]} : vector<50x20xf32> to vector<2x20xf32>
    %c0_20 = arith.constant 0 : index
    %c260 = arith.constant 260 : index
    %42 = vector.load %arg8[%c0_20, %c260] : memref<2x500xf32, #tpu.memory_space<vmem>>, vector<2x20xf32>
    tpu.vector_store %arg8[%c0_20, %c260], %41 {strides = array<i32>} : memref<2x500xf32, #tpu.memory_space<vmem>>, vector<2x20xf32>,
    %43 = vector.extract_strided_slice %14 {offsets = [28, 0], sizes = [2, 20], strides = [1, 1]} : vector<50x20xf32> to vector<2x20xf32>
    %c0_21 = arith.constant 0 : index
    %c280 = arith.constant 280 : index
    %44 = vector.load %arg8[%c0_21, %c280] : memref<2x500xf32, #tpu.memory_space<vmem>>, vector<2x20xf32>
    tpu.vector_store %arg8[%c0_21, %c280], %43 {strides = array<i32>} : memref<2x500xf32, #tpu.memory_space<vmem>>, vector<2x20xf32>,
    %45 = vector.extract_strided_slice %14 {offsets = [30, 0], sizes = [2, 20], strides = [1, 1]} : vector<50x20xf32> to vector<2x20xf32>
    %c0_22 = arith.constant 0 : index
    %c300 = arith.constant 300 : index
    %46 = vector.load %arg8[%c0_22, %c300] : memref<2x500xf32, #tpu.memory_space<vmem>>, vector<2x20xf32>
    tpu.vector_store %arg8[%c0_22, %c300], %45 {strides = array<i32>} : memref<2x500xf32, #tpu.memory_space<vmem>>, vector<2x20xf32>,
    %47 = vector.extract_strided_slice %14 {offsets = [32, 0], sizes = [2, 20], strides = [1, 1]} : vector<50x20xf32> to vector<2x20xf32>
    %c0_23 = arith.constant 0 : index
    %c320 = arith.constant 320 : index
    %48 = vector.load %arg8[%c0_23, %c320] : memref<2x500xf32, #tpu.memory_space<vmem>>, vector<2x20xf32>
    tpu.vector_store %arg8[%c0_23, %c320], %47 {strides = array<i32>} : memref<2x500xf32, #tpu.memory_space<vmem>>, vector<2x20xf32>,
    %49 = vector.extract_strided_slice %14 {offsets = [34, 0], sizes = [2, 20], strides = [1, 1]} : vector<50x20xf32> to vector<2x20xf32>
    %c0_24 = arith.constant 0 : index
    %c340 = arith.constant 340 : index
    %50 = vector.load %arg8[%c0_24, %c340] : memref<2x500xf32, #tpu.memory_space<vmem>>, vector<2x20xf32>
    tpu.vector_store %arg8[%c0_24, %c340], %49 {strides = array<i32>} : memref<2x500xf32, #tpu.memory_space<vmem>>, vector<2x20xf32>,
    %51 = vector.extract_strided_slice %14 {offsets = [36, 0], sizes = [2, 20], strides = [1, 1]} : vector<50x20xf32> to vector<2x20xf32>
    %c0_25 = arith.constant 0 : index
    %c360 = arith.constant 360 : index
    %52 = vector.load %arg8[%c0_25, %c360] : memref<2x500xf32, #tpu.memory_space<vmem>>, vector<2x20xf32>
    tpu.vector_store %arg8[%c0_25, %c360], %51 {strides = array<i32>} : memref<2x500xf32, #tpu.memory_space<vmem>>, vector<2x20xf32>,
    %53 = vector.extract_strided_slice %14 {offsets = [38, 0], sizes = [2, 20], strides = [1, 1]} : vector<50x20xf32> to vector<2x20xf32>
    %c0_26 = arith.constant 0 : index
    %c380 = arith.constant 380 : index
    %54 = vector.load %arg8[%c0_26, %c380] : memref<2x500xf32, #tpu.memory_space<vmem>>, vector<2x20xf32>
    tpu.vector_store %arg8[%c0_26, %c380], %53 {strides = array<i32>} : memref<2x500xf32, #tpu.memory_space<vmem>>, vector<2x20xf32>,
    %55 = vector.extract_strided_slice %14 {offsets = [40, 0], sizes = [2, 20], strides = [1, 1]} : vector<50x20xf32> to vector<2x20xf32>
    %c0_27 = arith.constant 0 : index
    %c400 = arith.constant 400 : index
    %56 = vector.load %arg8[%c0_27, %c400] : memref<2x500xf32, #tpu.memory_space<vmem>>, vector<2x20xf32>
    tpu.vector_store %arg8[%c0_27, %c400], %55 {strides = array<i32>} : memref<2x500xf32, #tpu.memory_space<vmem>>, vector<2x20xf32>,
    %57 = vector.extract_strided_slice %14 {offsets = [42, 0], sizes = [2, 20], strides = [1, 1]} : vector<50x20xf32> to vector<2x20xf32>
    %c0_28 = arith.constant 0 : index
    %c420 = arith.constant 420 : index
    %58 = vector.load %arg8[%c0_28, %c420] : memref<2x500xf32, #tpu.memory_space<vmem>>, vector<2x20xf32>
    tpu.vector_store %arg8[%c0_28, %c420], %57 {strides = array<i32>} : memref<2x500xf32, #tpu.memory_space<vmem>>, vector<2x20xf32>,
    %59 = vector.extract_strided_slice %14 {offsets = [44, 0], sizes = [2, 20], strides = [1, 1]} : vector<50x20xf32> to vector<2x20xf32>
    %c0_29 = arith.constant 0 : index
    %c440 = arith.constant 440 : index
    %60 = vector.load %arg8[%c0_29, %c440] : memref<2x500xf32, #tpu.memory_space<vmem>>, vector<2x20xf32>
    tpu.vector_store %arg8[%c0_29, %c440], %59 {strides = array<i32>} : memref<2x500xf32, #tpu.memory_space<vmem>>, vector<2x20xf32>,
    %61 = vector.extract_strided_slice %14 {offsets = [46, 0], sizes = [2, 20], strides = [1, 1]} : vector<50x20xf32> to vector<2x20xf32>
    %c0_30 = arith.constant 0 : index
    %c460 = arith.constant 460 : index
    %62 = vector.load %arg8[%c0_30, %c460] : memref<2x500xf32, #tpu.memory_space<vmem>>, vector<2x20xf32>
    tpu.vector_store %arg8[%c0_30, %c460], %61 {strides = array<i32>} : memref<2x500xf32, #tpu.memory_space<vmem>>, vector<2x20xf32>,
    %63 = vector.extract_strided_slice %14 {offsets = [48, 0], sizes = [2, 20], strides = [1, 1]} : vector<50x20xf32> to vector<2x20xf32>
    %c0_31 = arith.constant 0 : index
    %c480 = arith.constant 480 : index
    %64 = vector.load %arg8[%c0_31, %c480] : memref<2x500xf32, #tpu.memory_space<vmem>>, vector<2x20xf32>
    tpu.vector_store %arg8[%c0_31, %c480], %63 {strides = array<i32>} : memref<2x500xf32, #tpu.memory_space<vmem>>, vector<2x20xf32>,
    %c0_32 = arith.constant 0 : index
    %c0_33 = arith.constant 0 : index
    %65 = vector.load %arg8[%c0_32, %c0_33] : memref<2x500xf32, #tpu.memory_space<vmem>>, vector<2x500xf32>
    %66 = arith.truncf %65 : vector<2x500xf32> to vector<2x500xbf16>
    %c0_34 = arith.constant 0 : index
    %c0_35 = arith.constant 0 : index
    %67 = vector.load %arg3[%c0_34, %c0_35] : memref<500x40xbf16, #tpu.memory_space<vmem>>, vector<500x40xbf16>
    %cst_36 = arith.constant dense<0.000000e+00> : vector<2x40xf32>
    %68 = tpu.matmul %66, %67, %cst_36 {dimension_numbers = #tpu.dot_dimension_numbers<[1], [0], [0], [1], [0, 0, 1, 1], [], []>} : vector<2x500xbf16>, vector<500x40xbf16>, vector<2x40xf32> -> vector<2x40xf32>
    %c0_37 = arith.constant 0 : index
    %c0_38 = arith.constant 0 : index
    %69 = vector.load %arg4[%c0_37, %c0_38] : memref<1x40xf32, #tpu.memory_space<vmem>>, vector<1x40xf32>
    %70 = vector.broadcast %69 : vector<1x40xf32> to vector<2x40xf32>
    %71 = arith.addf %68, %70 : vector<2x40xf32>
    %cst_39 = arith.constant 0.000000e+00 : f32
    %72 = vector.broadcast %cst_39 : f32 to vector<2x40xf32>
    %73 = arith.maximumf %71, %72 : vector<2x40xf32>
    %74 = arith.truncf %73 : vector<2x40xf32> to vector<2x40xbf16>
    %c0_40 = arith.constant 0 : index
    %c0_41 = arith.constant 0 : index
    %75 = vector.load %arg5[%c0_40, %c0_41] : memref<40x10xbf16, #tpu.memory_space<vmem>>, vector<40x10xbf16>
    %cst_42 = arith.constant dense<0.000000e+00> : vector<2x10xf32>
    %76 = tpu.matmul %74, %75, %cst_42 {dimension_numbers = #tpu.dot_dimension_numbers<[1], [0], [0], [1], [0, 0, 1, 1], [], []>} : vector<2x40xbf16>, vector<40x10xbf16>, vector<2x10xf32> -> vector<2x10xf32>
    %c0_43 = arith.constant 0 : index
    %c0_44 = arith.constant 0 : index
    %77 = vector.load %arg6[%c0_43, %c0_44] : memref<1x10xf32, #tpu.memory_space<vmem>>, vector<1x10xf32>
    %78 = vector.broadcast %77 : vector<1x10xf32> to vector<2x10xf32>
    %79 = arith.addf %76, %78 : vector<2x10xf32>
    %cst_45 = arith.constant dense<0xFF800000> : vector<2xf32>
    %80 = vector.multi_reduction <maximumf>, %79, %cst_45 [1] : vector<2x10xf32> to vector<2xf32>
    %81 = vector.shape_cast %80 : vector<2xf32> to vector<2x1xf32>
    %82 = vector.broadcast %81 : vector<2x1xf32> to vector<2x10xf32>
    %83 = arith.subf %79, %82 : vector<2x10xf32>
    %84 = math.exp %83 : vector<2x10xf32>
    %cst_46 = arith.constant dense<0.000000e+00> : vector<2xf32>
    %85 = vector.multi_reduction <add>, %84, %cst_46 [1] : vector<2x10xf32> to vector<2xf32>
    %86 = vector.shape_cast %85 : vector<2xf32> to vector<2x1xf32>
    %87 = math.log %86 : vector<2x1xf32>
    %88 = vector.broadcast %87 : vector<2x1xf32> to vector<2x10xf32>
    %89 = arith.subf %83, %88 : vector<2x10xf32>
    %c0_47 = arith.constant 0 : index
    %c0_48 = arith.constant 0 : index
    %90 = vector.load %arg7[%c0_47, %c0_48] : memref<2x10xf32, #tpu.memory_space<vmem>>, vector<2x10xf32>
    tpu.vector_store %arg7[%c0_47, %c0_48], %89 {strides = array<i32>} : memref<2x10xf32, #tpu.memory_space<vmem>>, vector<2x10xf32>,
    return
  }
}

</mosaic_0001>

<llo_original>
// kernel: net_forward.2
$region0: #{net_forward.2}
  #allocation0 [shape = 'u32[]', space=smem, size = 0x4, offset = 0x4, fixed_abs, tag = 'smem constant byte address 0x4 - core index']
  #allocation1 [shape = 'u32[144,128]{1,0:T(1,128)}', space=vmem, size = 0x12000, scoped, tag = 'internal scratch']
  %s0 = inlined_call_operand.vmem [shape: bf16[100,2048], index: 0, kind: input, shape index: {}]
  %s1 = inlined_call_operand.vmem [shape: bf16[10,100], index: 1, kind: input, shape index: {}]
  %s2 = inlined_call_operand.vmem [shape: f32[10,1], index: 2, kind: input, shape index: {}]
  %s3 = inlined_call_operand.vmem [shape: bf16[10,512], index: 3, kind: output, shape index: {}]
  %s4 = sld [smem:[#allocation0]]
  $region22: #{net_forward.2} parent=0
    _
  %s6 = ssub.s32 1, %s4
  %s7 = scalar_select 0, %s6, %s4
  // Predicated region
  $region2: #{net_forward.2} parent=0 // pred_check
    _
  $region3: #{net_forward.2} parent=0 // pred_check_branch
    %9 = sbr.rel (0) target = $region5
  $region4: #{net_forward.2} parent=0 // pred_region
    _
  $region5: #{net_forward.2} parent=0 // pred_fallthru
    _
  // Predicated region
  $region6: #{net_forward.2} parent=0 // pred_check
    _
  $region7: #{net_forward.2} parent=0 // pred_check_branch
    %11 = sbr.rel (0) target = $region9
  $region8: #{net_forward.2} parent=0 // pred_region
    _
  $region9: #{net_forward.2} parent=0 // pred_fallthru
    _
  // Predicated region
  $region10: #{net_forward.2} parent=0 // pred_check
    _
  $region11: #{net_forward.2} parent=0 // pred_check_branch
    %13 = sbr.rel (0) target = $region13
  $region12: #{net_forward.2} parent=0 // pred_region
    _
  $region13: #{net_forward.2} parent=0 // pred_fallthru
    _
  %v15 = vld [vmem:[%s1] sm:$0xf]
  %v16 = vld [vmem:[%s1 + $0x4] sm:$0x1]
  %v17 = vld [vmem:[%s0] sm:$0xff]
  %v18 = vld [vmem:[%s0 + $0x8] sm:$0xff]
  %v19 = vld [vmem:[%s0 + $0x10] sm:$0xff]
  %v20 = vld [vmem:[%s0 + $0x18] sm:$0xff]
  %v21 = vld [vmem:[%s0 + $0x20] sm:$0xff]
  %v22 = vld [vmem:[%s0 + $0x28] sm:$0xff]
  %v23 = vld [vmem:[%s0 + $0x30] sm:$0xff]
  %v24 = vld [vmem:[%s0 + $0x38] sm:$0xff]
  %v25 = vld [vmem:[%s0 + $0x40] sm:$0xff]
  %v26 = vld [vmem:[%s0 + $0x48] sm:$0xff]
  %v27 = vld [vmem:[%s0 + $0x50] sm:$0xff]
  %v28 = vld [vmem:[%s0 + $0x58] sm:$0xff]
  %v29 = vld [vmem:[%s0 + $0x60] sm:$0xff]
  %v30 = vld [vmem:[%s0 + $0x68] sm:$0xff]
  %v31 = vld [vmem:[%s0 + $0x70] sm:$0xff]
  %v32 = vld [vmem:[%s0 + $0x78] sm:$0xff]
  %v33 = vld [vmem:[%s0 + $0x80] sm:$0xff]
  %v34 = vld [vmem:[%s0 + $0x88] sm:$0xff]
  %v35 = vld [vmem:[%s0 + $0x90] sm:$0xff]
  %v36 = vld [vmem:[%s0 + $0x98] sm:$0xff]
  %v37 = vld [vmem:[%s0 + $0xa0] sm:$0xff]
  %v38 = vld [vmem:[%s0 + $0xa8] sm:$0xff]
  %v39 = vld [vmem:[%s0 + $0xb0] sm:$0xff]
  %v40 = vld [vmem:[%s0 + $0xb8] sm:$0xff]
  %v41 = vld [vmem:[%s0 + $0xc0] sm:$0xff]
  %v42 = vld [vmem:[%s0 + $0xc8] sm:$0xff]
  %v43 = vld [vmem:[%s0 + $0xd0] sm:$0xff]
  %v44 = vld [vmem:[%s0 + $0xd8] sm:$0xff]
  %v45 = vld [vmem:[%s0 + $0xe0] sm:$0xff]
  %v46 = vld [vmem:[%s0 + $0xe8] sm:$0xff]
  %v47 = vld [vmem:[%s0 + $0xf0] sm:$0xff]
  %v48 = vld [vmem:[%s0 + $0xf8] sm:$0xff]
  %v49 = vld [vmem:[%s0 + $0x100] sm:$0xff]
  %v50 = vld [vmem:[%s0 + $0x108] sm:$0xff]
  %v51 = vld [vmem:[%s0 + $0x110] sm:$0xff]
  %v52 = vld [vmem:[%s0 + $0x118] sm:$0xff]
  %v53 = vld [vmem:[%s0 + $0x120] sm:$0xff]
  %v54 = vld [vmem:[%s0 + $0x128] sm:$0xff]
  %v55 = vld [vmem:[%s0 + $0x130] sm:$0xff]
  %v56 = vld [vmem:[%s0 + $0x138] sm:$0xff]
  %v57 = vld [vmem:[%s0 + $0x140] sm:$0xff]
  %v58 = vld [vmem:[%s0 + $0x148] sm:$0xff]
  %v59 = vld [vmem:[%s0 + $0x150] sm:$0xff]
  %v60 = vld [vmem:[%s0 + $0x158] sm:$0xff]
  %v61 = vld [vmem:[%s0 + $0x160] sm:$0xff]
  %v62 = vld [vmem:[%s0 + $0x168] sm:$0xff]
  %v63 = vld [vmem:[%s0 + $0x170] sm:$0xff]
  %v64 = vld [vmem:[%s0 + $0x178] sm:$0xff]
  %v65 = vld [vmem:[%s0 + $0x180] sm:$0xff]
  %v66 = vld [vmem:[%s0 + $0x188] sm:$0xff]
  %v67 = vld [vmem:[%s0 + $0x190] sm:$0xff]
  %v68 = vld [vmem:[%s0 + $0x198] sm:$0xff]
  %v69 = vld [vmem:[%s0 + $0x1a0] sm:$0xff]
  %v70 = vld [vmem:[%s0 + $0x1a8] sm:$0xff]
  %v71 = vld [vmem:[%s0 + $0x1b0] sm:$0xff]
  %v72 = vld [vmem:[%s0 + $0x1b8] sm:$0xff]
  %v73 = vld [vmem:[%s0 + $0x1c0] sm:$0xff]
  %v74 = vld [vmem:[%s0 + $0x1c8] sm:$0xff]
  %v75 = vld [vmem:[%s0 + $0x1d0] sm:$0xff]
  %v76 = vld [vmem:[%s0 + $0x1d8] sm:$0xff]
  %v77 = vld [vmem:[%s0 + $0x1e0] sm:$0xff]
  %v78 = vld [vmem:[%s0 + $0x1e8] sm:$0xff]
  %v79 = vld [vmem:[%s0 + $0x1f0] sm:$0xff]
  %v80 = vld [vmem:[%s0 + $0x1f8] sm:$0xff]
  %v81 = vld [vmem:[%s0 + $0x200] sm:$0xff]
  %v82 = vld [vmem:[%s0 + $0x208] sm:$0xff]
  %v83 = vld [vmem:[%s0 + $0x210] sm:$0xff]
  %v84 = vld [vmem:[%s0 + $0x218] sm:$0xff]
  %v85 = vld [vmem:[%s0 + $0x220] sm:$0xff]
  %v86 = vld [vmem:[%s0 + $0x228] sm:$0xff]
  %v87 = vld [vmem:[%s0 + $0x230] sm:$0xff]
  %v88 = vld [vmem:[%s0 + $0x238] sm:$0xff]
  %v89 = vld [vmem:[%s0 + $0x240] sm:$0xff]
  %v90 = vld [vmem:[%s0 + $0x248] sm:$0xff]
  %v91 = vld [vmem:[%s0 + $0x250] sm:$0xff]
  %v92 = vld [vmem:[%s0 + $0x258] sm:$0xff]
  %v93 = vld [vmem:[%s0 + $0x260] sm:$0xff]
  %v94 = vld [vmem:[%s0 + $0x268] sm:$0xff]
  %v95 = vld [vmem:[%s0 + $0x270] sm:$0xff]
  %v96 = vld [vmem:[%s0 + $0x278] sm:$0xff]
  %v97 = vld [vmem:[%s0 + $0x280] sm:$0xff]
  %v98 = vld [vmem:[%s0 + $0x288] sm:$0xff]
  %v99 = vld [vmem:[%s0 + $0x290] sm:$0xff]
  %v100 = vld [vmem:[%s0 + $0x298] sm:$0xff]
  %v101 = vld [vmem:[%s0 + $0x2a0] sm:$0xff]
  %v102 = vld [vmem:[%s0 + $0x2a8] sm:$0xff]
  %v103 = vld [vmem:[%s0 + $0x2b0] sm:$0xff]
  %v104 = vld [vmem:[%s0 + $0x2b8] sm:$0xff]
  %v105 = vld [vmem:[%s0 + $0x2c0] sm:$0xff]
  %v106 = vld [vmem:[%s0 + $0x2c8] sm:$0xff]
  %v107 = vld [vmem:[%s0 + $0x2d0] sm:$0xff]
  %v108 = vld [vmem:[%s0 + $0x2d8] sm:$0xff]
  %v109 = vld [vmem:[%s0 + $0x2e0] sm:$0xff]
  %v110 = vld [vmem:[%s0 + $0x2e8] sm:$0xff]
  %v111 = vld [vmem:[%s0 + $0x2f0] sm:$0xff]
  %v112 = vld [vmem:[%s0 + $0x2f8] sm:$0xff]
  %v113 = vld [vmem:[%s0 + $0x300] sm:$0x33]
  %v114 = vld [vmem:[%s0 + $0x308] sm:$0x33]
  %v115 = vld [vmem:[%s0 + $0x310] sm:$0x33]
  %v116 = vld [vmem:[%s0 + $0x318] sm:$0x33]
  %v117 = vld [vmem:[%s0 + $0x320] sm:$0x33]
  %v118 = vld [vmem:[%s0 + $0x328] sm:$0x33]
  %v119 = vld [vmem:[%s0 + $0x330] sm:$0x33]
  %v120 = vld [vmem:[%s0 + $0x338] sm:$0x33]
  %v123 = vunpack.c.l.b16 %v15
  %v124 = vunpack.c.l.b16 %v16
  %v125 = vpack.c.b16 %v124, %v123
  %v230 = vunpack.c.l.b16 %v17
  %v231 = vunpack.c.h.b16 %v17
  %v232 = vunpack.c.l.b16 %v18
  %v233 = vunpack.c.h.b16 %v18
  %v234 = vunpack.c.l.b16 %v19
  %v235 = vunpack.c.h.b16 %v19
  %v236 = vunpack.c.l.b16 %v20
  %v237 = vunpack.c.h.b16 %v20
  %v238 = vunpack.c.l.b16 %v21
  %v239 = vunpack.c.h.b16 %v21
  %v240 = vunpack.c.l.b16 %v22
  %v241 = vunpack.c.h.b16 %v22
  %v242 = vunpack.c.l.b16 %v23
  %v243 = vunpack.c.h.b16 %v23
  %v244 = vunpack.c.l.b16 %v24
  %v245 = vunpack.c.h.b16 %v24
  %v246 = vunpack.c.l.b16 %v25
  %v247 = vunpack.c.h.b16 %v25
  %v248 = vunpack.c.l.b16 %v26
  %v249 = vunpack.c.h.b16 %v26
  %v250 = vunpack.c.l.b16 %v27
  %v251 = vunpack.c.h.b16 %v27
  %v252 = vunpack.c.l.b16 %v28
  %v253 = vunpack.c.h.b16 %v28
  %v254 = vunpack.c.l.b16 %v29
  %v255 = vunpack.c.h.b16 %v29
  %v256 = vunpack.c.l.b16 %v30
  %v257 = vunpack.c.h.b16 %v30
  %v258 = vunpack.c.l.b16 %v31
  %v259 = vunpack.c.h.b16 %v31
  %v260 = vunpack.c.l.b16 %v32
  %v261 = vunpack.c.h.b16 %v32
  %v262 = vunpack.c.l.b16 %v33
  %v263 = vunpack.c.h.b16 %v33
  %v264 = vunpack.c.l.b16 %v34
  %v265 = vunpack.c.h.b16 %v34
  %v266 = vunpack.c.l.b16 %v35
  %v267 = vunpack.c.h.b16 %v35
  %v268 = vunpack.c.l.b16 %v36
  %v269 = vunpack.c.h.b16 %v36
  %v270 = vunpack.c.l.b16 %v37
  %v271 = vunpack.c.h.b16 %v37
  %v272 = vunpack.c.l.b16 %v38
  %v273 = vunpack.c.h.b16 %v38
  %v274 = vunpack.c.l.b16 %v39
  %v275 = vunpack.c.h.b16 %v39
  %v276 = vunpack.c.l.b16 %v40
  %v277 = vunpack.c.h.b16 %v40
  %v278 = vunpack.c.l.b16 %v41
  %v279 = vunpack.c.h.b16 %v41
  %v280 = vunpack.c.l.b16 %v42
  %v281 = vunpack.c.h.b16 %v42
  %v282 = vunpack.c.l.b16 %v43
  %v283 = vunpack.c.h.b16 %v43
  %v284 = vunpack.c.l.b16 %v44
  %v285 = vunpack.c.h.b16 %v44
  %v286 = vunpack.c.l.b16 %v45
  %v287 = vunpack.c.h.b16 %v45
  %v288 = vunpack.c.l.b16 %v46
  %v289 = vunpack.c.h.b16 %v46
  %v290 = vunpack.c.l.b16 %v47
  %v291 = vunpack.c.h.b16 %v47
  %v292 = vunpack.c.l.b16 %v48
  %v293 = vunpack.c.h.b16 %v48
  %v294 = vunpack.c.l.b16 %v49
  %v295 = vunpack.c.h.b16 %v49
  %v296 = vunpack.c.l.b16 %v50
  %v297 = vunpack.c.h.b16 %v50
  %v298 = vunpack.c.l.b16 %v51
  %v299 = vunpack.c.h.b16 %v51
  %v300 = vunpack.c.l.b16 %v52
  %v301 = vunpack.c.h.b16 %v52
  %v302 = vunpack.c.l.b16 %v53
  %v303 = vunpack.c.h.b16 %v53
  %v304 = vunpack.c.l.b16 %v54
  %v305 = vunpack.c.h.b16 %v54
  %v306 = vunpack.c.l.b16 %v55
  %v307 = vunpack.c.h.b16 %v55
  %v308 = vunpack.c.l.b16 %v56
  %v309 = vunpack.c.h.b16 %v56
  %v310 = vunpack.c.l.b16 %v57
  %v311 = vunpack.c.h.b16 %v57
  %v312 = vunpack.c.l.b16 %v58
  %v313 = vunpack.c.h.b16 %v58
  %v314 = vunpack.c.l.b16 %v59
  %v315 = vunpack.c.h.b16 %v59
  %v316 = vunpack.c.l.b16 %v60
  %v317 = vunpack.c.h.b16 %v60
  %v318 = vunpack.c.l.b16 %v61
  %v319 = vunpack.c.h.b16 %v61
  %v320 = vunpack.c.l.b16 %v62
  %v321 = vunpack.c.h.b16 %v62
  %v322 = vunpack.c.l.b16 %v63
  %v323 = vunpack.c.h.b16 %v63
  %v324 = vunpack.c.l.b16 %v64
  %v325 = vunpack.c.h.b16 %v64
  %v326 = vunpack.c.l.b16 %v65
  %v327 = vunpack.c.h.b16 %v65
  %v328 = vunpack.c.l.b16 %v66
  %v329 = vunpack.c.h.b16 %v66
  %v330 = vunpack.c.l.b16 %v67
  %v331 = vunpack.c.h.b16 %v67
  %v332 = vunpack.c.l.b16 %v68
  %v333 = vunpack.c.h.b16 %v68
  %v334 = vunpack.c.l.b16 %v69
  %v335 = vunpack.c.h.b16 %v69
  %v336 = vunpack.c.l.b16 %v70
  %v337 = vunpack.c.h.b16 %v70
  %v338 = vunpack.c.l.b16 %v71
  %v339 = vunpack.c.h.b16 %v71
  %v340 = vunpack.c.l.b16 %v72
  %v341 = vunpack.c.h.b16 %v72
  %v342 = vunpack.c.l.b16 %v73
  %v343 = vunpack.c.h.b16 %v73
  %v344 = vunpack.c.l.b16 %v74
  %v345 = vunpack.c.h.b16 %v74
  %v346 = vunpack.c.l.b16 %v75
  %v347 = vunpack.c.h.b16 %v75
  %v348 = vunpack.c.l.b16 %v76
  %v349 = vunpack.c.h.b16 %v76
  %v350 = vunpack.c.l.b16 %v77
  %v351 = vunpack.c.h.b16 %v77
  %v352 = vunpack.c.l.b16 %v78
  %v353 = vunpack.c.h.b16 %v78
  %v354 = vunpack.c.l.b16 %v79
  %v355 = vunpack.c.h.b16 %v79
  %v356 = vunpack.c.l.b16 %v80
  %v357 = vunpack.c.h.b16 %v80
  %v358 = vunpack.c.l.b16 %v81
  %v359 = vunpack.c.h.b16 %v81
  %v360 = vunpack.c.l.b16 %v82
  %v361 = vunpack.c.h.b16 %v82
  %v362 = vunpack.c.l.b16 %v83
  %v363 = vunpack.c.h.b16 %v83
  %v364 = vunpack.c.l.b16 %v84
  %v365 = vunpack.c.h.b16 %v84
  %v366 = vunpack.c.l.b16 %v85
  %v367 = vunpack.c.h.b16 %v85
  %v368 = vunpack.c.l.b16 %v86
  %v369 = vunpack.c.h.b16 %v86
  %v370 = vunpack.c.l.b16 %v87
  %v371 = vunpack.c.h.b16 %v87
  %v372 = vunpack.c.l.b16 %v88
  %v373 = vunpack.c.h.b16 %v88
  %v374 = vunpack.c.l.b16 %v89
  %v375 = vunpack.c.h.b16 %v89
  %v376 = vunpack.c.l.b16 %v90
  %v377 = vunpack.c.h.b16 %v90
  %v378 = vunpack.c.l.b16 %v91
  %v379 = vunpack.c.h.b16 %v91
  %v380 = vunpack.c.l.b16 %v92
  %v381 = vunpack.c.h.b16 %v92
  %v382 = vunpack.c.l.b16 %v93
  %v383 = vunpack.c.h.b16 %v93
  %v384 = vunpack.c.l.b16 %v94
  %v385 = vunpack.c.h.b16 %v94
  %v386 = vunpack.c.l.b16 %v95
  %v387 = vunpack.c.h.b16 %v95
  %v388 = vunpack.c.l.b16 %v96
  %v389 = vunpack.c.h.b16 %v96
  %v390 = vunpack.c.l.b16 %v97
  %v391 = vunpack.c.h.b16 %v97
  %v392 = vunpack.c.l.b16 %v98
  %v393 = vunpack.c.h.b16 %v98
  %v394 = vunpack.c.l.b16 %v99
  %v395 = vunpack.c.h.b16 %v99
  %v396 = vunpack.c.l.b16 %v100
  %v397 = vunpack.c.h.b16 %v100
  %v398 = vunpack.c.l.b16 %v101
  %v399 = vunpack.c.h.b16 %v101
  %v400 = vunpack.c.l.b16 %v102
  %v401 = vunpack.c.h.b16 %v102
  %v402 = vunpack.c.l.b16 %v103
  %v403 = vunpack.c.h.b16 %v103
  %v404 = vunpack.c.l.b16 %v104
  %v405 = vunpack.c.h.b16 %v104
  %v406 = vunpack.c.l.b16 %v105
  %v407 = vunpack.c.h.b16 %v105
  %v408 = vunpack.c.l.b16 %v106
  %v409 = vunpack.c.h.b16 %v106
  %v410 = vunpack.c.l.b16 %v107
  %v411 = vunpack.c.h.b16 %v107
  %v412 = vunpack.c.l.b16 %v108
  %v413 = vunpack.c.h.b16 %v108
  %v414 = vunpack.c.l.b16 %v109
  %v415 = vunpack.c.h.b16 %v109
  %v416 = vunpack.c.l.b16 %v110
  %v417 = vunpack.c.h.b16 %v110
  %v418 = vunpack.c.l.b16 %v111
  %v419 = vunpack.c.h.b16 %v111
  %v420 = vunpack.c.l.b16 %v112
  %v421 = vunpack.c.h.b16 %v112
  %v422 = vunpack.c.l.b16 %v113
  %v423 = vunpack.c.h.b16 %v113
  %v424 = vunpack.c.l.b16 %v114
  %v425 = vunpack.c.h.b16 %v114
  %v426 = vunpack.c.l.b16 %v115
  %v427 = vunpack.c.h.b16 %v115
  %v428 = vunpack.c.l.b16 %v116
  %v429 = vunpack.c.h.b16 %v116
  %v430 = vunpack.c.l.b16 %v117
  %v431 = vunpack.c.h.b16 %v117
  %v432 = vunpack.c.l.b16 %v118
  %v433 = vunpack.c.h.b16 %v118
  %v434 = vunpack.c.l.b16 %v119
  %v435 = vunpack.c.h.b16 %v119
  %v436 = vunpack.c.l.b16 %v120
  %v437 = vunpack.c.h.b16 %v120
  %v438 = vpack.c.b16 %v246, %v230
  %v439 = vpack.c.b16 %v247, %v231
  %v440 = vpack.c.b16 %v248, %v232
  %v441 = vpack.c.b16 %v249, %v233
  %v442 = vpack.c.b16 %v250, %v234
  %v443 = vpack.c.b16 %v251, %v235
  %v444 = vpack.c.b16 %v252, %v236
  %v445 = vpack.c.b16 %v253, %v237
  %v446 = vpack.c.b16 %v254, %v238
  %v447 = vpack.c.b16 %v255, %v239
  %v448 = vpack.c.b16 %v256, %v240
  %v449 = vpack.c.b16 %v257, %v241
  %v450 = vpack.c.b16 %v258, %v242
  %v451 = vpack.c.b16 %v259, %v243
  %v452 = vpack.c.b16 %v260, %v244
  %v453 = vpack.c.b16 %v261, %v245
  %v454 = vpack.c.b16 %v278, %v262
  %v455 = vpack.c.b16 %v279, %v263
  %v456 = vpack.c.b16 %v280, %v264
  %v457 = vpack.c.b16 %v281, %v265
  %v458 = vpack.c.b16 %v282, %v266
  %v459 = vpack.c.b16 %v283, %v267
  %v460 = vpack.c.b16 %v284, %v268
  %v461 = vpack.c.b16 %v285, %v269
  %v462 = vpack.c.b16 %v286, %v270
  %v463 = vpack.c.b16 %v287, %v271
  %v464 = vpack.c.b16 %v288, %v272
  %v465 = vpack.c.b16 %v289, %v273
  %v466 = vpack.c.b16 %v290, %v274
  %v467 = vpack.c.b16 %v291, %v275
  %v468 = vpack.c.b16 %v292, %v276
  %v469 = vpack.c.b16 %v293, %v277
  %v470 = vpack.c.b16 %v310, %v294
  %v471 = vpack.c.b16 %v311, %v295
  %v472 = vpack.c.b16 %v312, %v296
  %v473 = vpack.c.b16 %v313, %v297
  %v474 = vpack.c.b16 %v314, %v298
  %v475 = vpack.c.b16 %v315, %v299
  %v476 = vpack.c.b16 %v316, %v300
  %v477 = vpack.c.b16 %v317, %v301
  %v478 = vpack.c.b16 %v318, %v302
  %v479 = vpack.c.b16 %v319, %v303
  %v480 = vpack.c.b16 %v320, %v304
  %v481 = vpack.c.b16 %v321, %v305
  %v482 = vpack.c.b16 %v322, %v306
  %v483 = vpack.c.b16 %v323, %v307
  %v484 = vpack.c.b16 %v324, %v308
  %v485 = vpack.c.b16 %v325, %v309
  %v486 = vpack.c.b16 %v342, %v326
  %v487 = vpack.c.b16 %v343, %v327
  %v488 = vpack.c.b16 %v344, %v328
  %v489 = vpack.c.b16 %v345, %v329
  %v490 = vpack.c.b16 %v346, %v330
  %v491 = vpack.c.b16 %v347, %v331
  %v492 = vpack.c.b16 %v348, %v332
  %v493 = vpack.c.b16 %v349, %v333
  %v494 = vpack.c.b16 %v350, %v334
  %v495 = vpack.c.b16 %v351, %v335
  %v496 = vpack.c.b16 %v352, %v336
  %v497 = vpack.c.b16 %v353, %v337
  %v498 = vpack.c.b16 %v354, %v338
  %v499 = vpack.c.b16 %v355, %v339
  %v500 = vpack.c.b16 %v356, %v340
  %v501 = vpack.c.b16 %v357, %v341
  %v502 = vpack.c.b16 %v374, %v358
  %v503 = vpack.c.b16 %v375, %v359
  %v504 = vpack.c.b16 %v376, %v360
  %v505 = vpack.c.b16 %v377, %v361
  %v506 = vpack.c.b16 %v378, %v362
  %v507 = vpack.c.b16 %v379, %v363
  %v508 = vpack.c.b16 %v380, %v364
  %v509 = vpack.c.b16 %v381, %v365
  %v510 = vpack.c.b16 %v382, %v366
  %v511 = vpack.c.b16 %v383, %v367
  %v512 = vpack.c.b16 %v384, %v368
  %v513 = vpack.c.b16 %v385, %v369
  %v514 = vpack.c.b16 %v386, %v370
  %v515 = vpack.c.b16 %v387, %v371
  %v516 = vpack.c.b16 %v388, %v372
  %v517 = vpack.c.b16 %v389, %v373
  %v518 = vpack.c.b16 %v406, %v390
  %v519 = vpack.c.b16 %v407, %v391
  %v520 = vpack.c.b16 %v408, %v392
  %v521 = vpack.c.b16 %v409, %v393
  %v522 = vpack.c.b16 %v410, %v394
  %v523 = vpack.c.b16 %v411, %v395
  %v524 = vpack.c.b16 %v412, %v396
  %v525 = vpack.c.b16 %v413, %v397
  %v526 = vpack.c.b16 %v414, %v398
  %v527 = vpack.c.b16 %v415, %v399
  %v528 = vpack.c.b16 %v416, %v400
  %v529 = vpack.c.b16 %v417, %v401
  %v530 = vpack.c.b16 %v418, %v402
  %v531 = vpack.c.b16 %v419, %v403
  %v532 = vpack.c.b16 %v420, %v404
  %v533 = vpack.c.b16 %v421, %v405
  %v534 = vpack.c.b16 %v422, %v422
  %v535 = vpack.c.b16 %v423, %v423
  %v536 = vpack.c.b16 %v424, %v424
  %v537 = vpack.c.b16 %v425, %v425
  %v538 = vpack.c.b16 %v426, %v426
  %v539 = vpack.c.b16 %v427, %v427
  %v540 = vpack.c.b16 %v428, %v428
  %v541 = vpack.c.b16 %v429, %v429
  %v542 = vpack.c.b16 %v430, %v430
  %v543 = vpack.c.b16 %v431, %v431
  %v544 = vpack.c.b16 %v432, %v432
  %v545 = vpack.c.b16 %v433, %v433
  %v546 = vpack.c.b16 %v434, %v434
  %v547 = vpack.c.b16 %v435, %v435
  %v548 = vpack.c.b16 %v436, %v436
  %v549 = vpack.c.b16 %v437, %v437
  %vm646 = vcmask 818176
  %v648 = vsel %vm646, %v125, 0
  %vm650 = vcmask 1041408
  %v652 = vsel %vm650, %v534, 0
  %v655 = vsel %vm650, %v535, 0
  %v658 = vsel %vm650, %v536, 0
  %v661 = vsel %vm650, %v537, 0
  %v664 = vsel %vm650, %v538, 0
  %v667 = vsel %vm650, %v539, 0
  %v670 = vsel %vm650, %v540, 0
  %v673 = vsel %vm650, %v541, 0
  %v676 = vsel %vm650, %v542, 0
  %v679 = vsel %vm650, %v543, 0
  %v682 = vsel %vm650, %v544, 0
  %v685 = vsel %vm650, %v545, 0
  %v688 = vsel %vm650, %v546, 0
  %v691 = vsel %vm650, %v547, 0
  %v694 = vsel %vm650, %v548, 0
  %v697 = vsel %vm650, %v549, 0
  %699 = vmatprep.subr.bf16.mxu0 %v439
  %700 = vmatpush1.bf16.msra.mxu0 %v438
  %701 = vmatprep.subr.bf16.mxu0 %v455
  %702 = vmatpush1.bf16.msra.mxu0 %v454
  %703 = vmatprep.subr.bf16.mxu0 %v471
  %704 = vmatpush1.bf16.msra.mxu0 %v470
  %705 = vmatprep.subr.bf16.mxu0 %v487
  %706 = vmatpush1.bf16.msra.mxu0 %v486
  %707 = vmatprep.subr.bf16.mxu0 %v503
  %708 = vmatpush1.bf16.msra.mxu0 %v502
  %709 = vmatprep.subr.bf16.mxu0 %v519
  %710 = vmatpush1.bf16.msra.mxu0 %v518
  %711 = vmatprep.subr.bf16.mxu0 %v655
  %712 = vmatpush1.bf16.msra.mxu0 %v652
  %713 = vmatprep.subr.bf16.mxu0 0
  %714 = vmatpush1.bf16.msra.mxu0 0
  %715 = vmatprep.subr.bf16.mxu0 0
  %716 = vmatpush1.bf16.msra.mxu0 0
  %717 = vmatprep.subr.bf16.mxu0 0
  %718 = vmatpush1.bf16.msra.mxu0 0
  %719 = vmatprep.subr.bf16.mxu0 0
  %720 = vmatpush1.bf16.msra.mxu0 0
  %721 = vmatprep.subr.bf16.mxu0 0
  %722 = vmatpush1.bf16.msra.mxu0 0
  %723 = vmatprep.subr.bf16.mxu0 0
  %724 = vmatpush1.bf16.msra.mxu0 0
  %725 = vmatprep.subr.bf16.mxu0 0
  %726 = vmatpush1.bf16.msra.mxu0 0
  %727 = vmatprep.subr.bf16.mxu0 0
  %728 = vmatpush1.bf16.msra.mxu0 0
  %729 = vmatprep.subr.bf16.mxu0 0
  %730 = vmatpush1.bf16.msra.mxu0 0
  %731 = vmatprep.mubr.bf16.mxu0 0
  %732 = vmatmul.mubr.bf16.gmra.mrb[0].mxu0 %v648
  %v733 = vpop.f32.mrb[0].mxu0
  %v734 = vadd.f32 0.0, %v733
  %v735 = vpop.f32.mrb[0].mxu0
  %v736 = vadd.f32 0.0, %v735
  %v737 = vpop.f32.mrb[0].mxu0
  %v738 = vadd.f32 0.0, %v737
  %v739 = vpop.f32.mrb[0].mxu0
  %v740 = vadd.f32 0.0, %v739
  %741 = vdwg.mxu0
  %742 = vmatprep.subr.bf16.mxu0 %v441
  %743 = vmatpush1.bf16.msra.mxu0 %v440
  %744 = vmatprep.subr.bf16.mxu0 %v457
  %745 = vmatpush1.bf16.msra.mxu0 %v456
  %746 = vmatprep.subr.bf16.mxu0 %v473
  %747 = vmatpush1.bf16.msra.mxu0 %v472
  %748 = vmatprep.subr.bf16.mxu0 %v489
  %749 = vmatpush1.bf16.msra.mxu0 %v488
  %750 = vmatprep.subr.bf16.mxu0 %v505
  %751 = vmatpush1.bf16.msra.mxu0 %v504
  %752 = vmatprep.subr.bf16.mxu0 %v521
  %753 = vmatpush1.bf16.msra.mxu0 %v520
  %754 = vmatprep.subr.bf16.mxu0 %v661
  %755 = vmatpush1.bf16.msra.mxu0 %v658
  %756 = vmatprep.subr.bf16.mxu0 0
  %757 = vmatpush1.bf16.msra.mxu0 0
  %758 = vmatprep.subr.bf16.mxu0 0
  %759 = vmatpush1.bf16.msra.mxu0 0
  %760 = vmatprep.subr.bf16.mxu0 0
  %761 = vmatpush1.bf16.msra.mxu0 0
  %762 = vmatprep.subr.bf16.mxu0 0
  %763 = vmatpush1.bf16.msra.mxu0 0
  %764 = vmatprep.subr.bf16.mxu0 0
  %765 = vmatpush1.bf16.msra.mxu0 0
  %766 = vmatprep.subr.bf16.mxu0 0
  %767 = vmatpush1.bf16.msra.mxu0 0
  %768 = vmatprep.subr.bf16.mxu0 0
  %769 = vmatpush1.bf16.msra.mxu0 0
  %770 = vmatprep.subr.bf16.mxu0 0
  %771 = vmatpush1.bf16.msra.mxu0 0
  %772 = vmatprep.subr.bf16.mxu0 0
  %773 = vmatpush1.bf16.msra.mxu0 0
  %774 = vmatprep.mubr.bf16.mxu0 0
  %775 = vmatmul.mubr.bf16.gmra.mrb[0].mxu0 %v648
  %v776 = vpop.f32.mrb[0].mxu0
  %v777 = vadd.f32 0.0, %v776
  %v778 = vpop.f32.mrb[0].mxu0
  %v779 = vadd.f32 0.0, %v778
  %v780 = vpop.f32.mrb[0].mxu0
  %v781 = vadd.f32 0.0, %v780
  %v782 = vpop.f32.mrb[0].mxu0
  %v783 = vadd.f32 0.0, %v782
  %784 = vdwg.mxu0
  %785 = vmatprep.subr.bf16.mxu0 %v443
  %786 = vmatpush1.bf16.msra.mxu0 %v442
  %787 = vmatprep.subr.bf16.mxu0 %v459
  %788 = vmatpush1.bf16.msra.mxu0 %v458
  %789 = vmatprep.subr.bf16.mxu0 %v475
  %790 = vmatpush1.bf16.msra.mxu0 %v474
  %791 = vmatprep.subr.bf16.mxu0 %v491
  %792 = vmatpush1.bf16.msra.mxu0 %v490
  %793 = vmatprep.subr.bf16.mxu0 %v507
  %794 = vmatpush1.bf16.msra.mxu0 %v506
  %795 = vmatprep.subr.bf16.mxu0 %v523
  %796 = vmatpush1.bf16.msra.mxu0 %v522
  %797 = vmatprep.subr.bf16.mxu0 %v667
  %798 = vmatpush1.bf16.msra.mxu0 %v664
  %799 = vmatprep.subr.bf16.mxu0 0
  %800 = vmatpush1.bf16.msra.mxu0 0
  %801 = vmatprep.subr.bf16.mxu0 0
  %802 = vmatpush1.bf16.msra.mxu0 0
  %803 = vmatprep.subr.bf16.mxu0 0
  %804 = vmatpush1.bf16.msra.mxu0 0
  %805 = vmatprep.subr.bf16.mxu0 0
  %806 = vmatpush1.bf16.msra.mxu0 0
  %807 = vmatprep.subr.bf16.mxu0 0
  %808 = vmatpush1.bf16.msra.mxu0 0
  %809 = vmatprep.subr.bf16.mxu0 0
  %810 = vmatpush1.bf16.msra.mxu0 0
  %811 = vmatprep.subr.bf16.mxu0 0
  %812 = vmatpush1.bf16.msra.mxu0 0
  %813 = vmatprep.subr.bf16.mxu0 0
  %814 = vmatpush1.bf16.msra.mxu0 0
  %815 = vmatprep.subr.bf16.mxu0 0
  %816 = vmatpush1.bf16.msra.mxu0 0
  %817 = vmatprep.mubr.bf16.mxu0 0
  %818 = vmatmul.mubr.bf16.gmra.mrb[0].mxu0 %v648
  %v819 = vpop.f32.mrb[0].mxu0
  %v820 = vadd.f32 0.0, %v819
  %v821 = vpop.f32.mrb[0].mxu0
  %v822 = vadd.f32 0.0, %v821
  %v823 = vpop.f32.mrb[0].mxu0
  %v824 = vadd.f32 0.0, %v823
  %v825 = vpop.f32.mrb[0].mxu0
  %v826 = vadd.f32 0.0, %v825
  %827 = vdwg.mxu0
  %828 = vmatprep.subr.bf16.mxu0 %v445
  %829 = vmatpush1.bf16.msra.mxu0 %v444
  %830 = vmatprep.subr.bf16.mxu0 %v461
  %831 = vmatpush1.bf16.msra.mxu0 %v460
  %832 = vmatprep.subr.bf16.mxu0 %v477
  %833 = vmatpush1.bf16.msra.mxu0 %v476
  %834 = vmatprep.subr.bf16.mxu0 %v493
  %835 = vmatpush1.bf16.msra.mxu0 %v492
  %836 = vmatprep.subr.bf16.mxu0 %v509
  %837 = vmatpush1.bf16.msra.mxu0 %v508
  %838 = vmatprep.subr.bf16.mxu0 %v525
  %839 = vmatpush1.bf16.msra.mxu0 %v524
  %840 = vmatprep.subr.bf16.mxu0 %v673
  %841 = vmatpush1.bf16.msra.mxu0 %v670
  %842 = vmatprep.subr.bf16.mxu0 0
  %843 = vmatpush1.bf16.msra.mxu0 0
  %844 = vmatprep.subr.bf16.mxu0 0
  %845 = vmatpush1.bf16.msra.mxu0 0
  %846 = vmatprep.subr.bf16.mxu0 0
  %847 = vmatpush1.bf16.msra.mxu0 0
  %848 = vmatprep.subr.bf16.mxu0 0
  %849 = vmatpush1.bf16.msra.mxu0 0
  %850 = vmatprep.subr.bf16.mxu0 0
  %851 = vmatpush1.bf16.msra.mxu0 0
  %852 = vmatprep.subr.bf16.mxu0 0
  %853 = vmatpush1.bf16.msra.mxu0 0
  %854 = vmatprep.subr.bf16.mxu0 0
  %855 = vmatpush1.bf16.msra.mxu0 0
  %856 = vmatprep.subr.bf16.mxu0 0
  %857 = vmatpush1.bf16.msra.mxu0 0
  %858 = vmatprep.subr.bf16.mxu0 0
  %859 = vmatpush1.bf16.msra.mxu0 0
  %860 = vmatprep.mubr.bf16.mxu0 0
  %861 = vmatmul.mubr.bf16.gmra.mrb[0].mxu0 %v648
  %v862 = vpop.f32.mrb[0].mxu0
  %v863 = vadd.f32 0.0, %v862
  %v864 = vpop.f32.mrb[0].mxu0
  %v865 = vadd.f32 0.0, %v864
  %v866 = vpop.f32.mrb[0].mxu0
  %v867 = vadd.f32 0.0, %v866
  %v868 = vpop.f32.mrb[0].mxu0
  %v869 = vadd.f32 0.0, %v868
  %870 = vdwg.mxu0
  %871 = vmatprep.subr.bf16.mxu0 %v447
  %872 = vmatpush1.bf16.msra.mxu0 %v446
  %873 = vmatprep.subr.bf16.mxu0 %v463
  %874 = vmatpush1.bf16.msra.mxu0 %v462
  %875 = vmatprep.subr.bf16.mxu0 %v479
  %876 = vmatpush1.bf16.msra.mxu0 %v478
  %877 = vmatprep.subr.bf16.mxu0 %v495
  %878 = vmatpush1.bf16.msra.mxu0 %v494
  %879 = vmatprep.subr.bf16.mxu0 %v511
  %880 = vmatpush1.bf16.msra.mxu0 %v510
  %881 = vmatprep.subr.bf16.mxu0 %v527
  %882 = vmatpush1.bf16.msra.mxu0 %v526
  %883 = vmatprep.subr.bf16.mxu0 %v679
  %884 = vmatpush1.bf16.msra.mxu0 %v676
  %885 = vmatprep.subr.bf16.mxu0 0
  %886 = vmatpush1.bf16.msra.mxu0 0
  %887 = vmatprep.subr.bf16.mxu0 0
  %888 = vmatpush1.bf16.msra.mxu0 0
  %889 = vmatprep.subr.bf16.mxu0 0
  %890 = vmatpush1.bf16.msra.mxu0 0
  %891 = vmatprep.subr.bf16.mxu0 0
  %892 = vmatpush1.bf16.msra.mxu0 0
  %893 = vmatprep.subr.bf16.mxu0 0
  %894 = vmatpush1.bf16.msra.mxu0 0
  %895 = vmatprep.subr.bf16.mxu0 0
  %896 = vmatpush1.bf16.msra.mxu0 0
  %897 = vmatprep.subr.bf16.mxu0 0
  %898 = vmatpush1.bf16.msra.mxu0 0
  %899 = vmatprep.subr.bf16.mxu0 0
  %900 = vmatpush1.bf16.msra.mxu0 0
  %901 = vmatprep.subr.bf16.mxu0 0
  %902 = vmatpush1.bf16.msra.mxu0 0
  %903 = vmatprep.mubr.bf16.mxu0 0
  %904 = vmatmul.mubr.bf16.gmra.mrb[0].mxu0 %v648
  %v905 = vpop.f32.mrb[0].mxu0
  %v906 = vadd.f32 0.0, %v905
  %v907 = vpop.f32.mrb[0].mxu0
  %v908 = vadd.f32 0.0, %v907
  %v909 = vpop.f32.mrb[0].mxu0
  %v910 = vadd.f32 0.0, %v909
  %v911 = vpop.f32.mrb[0].mxu0
  %v912 = vadd.f32 0.0, %v911
  %913 = vdwg.mxu0
  %914 = vmatprep.subr.bf16.mxu0 %v449
  %915 = vmatpush1.bf16.msra.mxu0 %v448
  %916 = vmatprep.subr.bf16.mxu0 %v465
  %917 = vmatpush1.bf16.msra.mxu0 %v464
  %918 = vmatprep.subr.bf16.mxu0 %v481
  %919 = vmatpush1.bf16.msra.mxu0 %v480
  %920 = vmatprep.subr.bf16.mxu0 %v497
  %921 = vmatpush1.bf16.msra.mxu0 %v496
  %922 = vmatprep.subr.bf16.mxu0 %v513
  %923 = vmatpush1.bf16.msra.mxu0 %v512
  %924 = vmatprep.subr.bf16.mxu0 %v529
  %925 = vmatpush1.bf16.msra.mxu0 %v528
  %926 = vmatprep.subr.bf16.mxu0 %v685
  %927 = vmatpush1.bf16.msra.mxu0 %v682
  %928 = vmatprep.subr.bf16.mxu0 0
  %929 = vmatpush1.bf16.msra.mxu0 0
  %930 = vmatprep.subr.bf16.mxu0 0
  %931 = vmatpush1.bf16.msra.mxu0 0
  %932 = vmatprep.subr.bf16.mxu0 0
  %933 = vmatpush1.bf16.msra.mxu0 0
  %934 = vmatprep.subr.bf16.mxu0 0
  %935 = vmatpush1.bf16.msra.mxu0 0
  %936 = vmatprep.subr.bf16.mxu0 0
  %937 = vmatpush1.bf16.msra.mxu0 0
  %938 = vmatprep.subr.bf16.mxu0 0
  %939 = vmatpush1.bf16.msra.mxu0 0
  %940 = vmatprep.subr.bf16.mxu0 0
  %941 = vmatpush1.bf16.msra.mxu0 0
  %942 = vmatprep.subr.bf16.mxu0 0
  %943 = vmatpush1.bf16.msra.mxu0 0
  %944 = vmatprep.subr.bf16.mxu0 0
  %945 = vmatpush1.bf16.msra.mxu0 0
  %946 = vmatprep.mubr.bf16.mxu0 0
  %947 = vmatmul.mubr.bf16.gmra.mrb[0].mxu0 %v648
  %v948 = vpop.f32.mrb[0].mxu0
  %v949 = vadd.f32 0.0, %v948
  %v950 = vpop.f32.mrb[0].mxu0
  %v951 = vadd.f32 0.0, %v950
  %v952 = vpop.f32.mrb[0].mxu0
  %v953 = vadd.f32 0.0, %v952
  %v954 = vpop.f32.mrb[0].mxu0
  %v955 = vadd.f32 0.0, %v954
  %956 = vdwg.mxu0
  %957 = vmatprep.subr.bf16.mxu0 %v451
  %958 = vmatpush1.bf16.msra.mxu0 %v450
  %959 = vmatprep.subr.bf16.mxu0 %v467
  %960 = vmatpush1.bf16.msra.mxu0 %v466
  %961 = vmatprep.subr.bf16.mxu0 %v483
  %962 = vmatpush1.bf16.msra.mxu0 %v482
  %963 = vmatprep.subr.bf16.mxu0 %v499
  %964 = vmatpush1.bf16.msra.mxu0 %v498
  %965 = vmatprep.subr.bf16.mxu0 %v515
  %966 = vmatpush1.bf16.msra.mxu0 %v514
  %967 = vmatprep.subr.bf16.mxu0 %v531
  %968 = vmatpush1.bf16.msra.mxu0 %v530
  %969 = vmatprep.subr.bf16.mxu0 %v691
  %970 = vmatpush1.bf16.msra.mxu0 %v688
  %971 = vmatprep.subr.bf16.mxu0 0
  %972 = vmatpush1.bf16.msra.mxu0 0
  %973 = vmatprep.subr.bf16.mxu0 0
  %974 = vmatpush1.bf16.msra.mxu0 0
  %975 = vmatprep.subr.bf16.mxu0 0
  %976 = vmatpush1.bf16.msra.mxu0 0
  %977 = vmatprep.subr.bf16.mxu0 0
  %978 = vmatpush1.bf16.msra.mxu0 0
  %979 = vmatprep.subr.bf16.mxu0 0
  %980 = vmatpush1.bf16.msra.mxu0 0
  %981 = vmatprep.subr.bf16.mxu0 0
  %982 = vmatpush1.bf16.msra.mxu0 0
  %983 = vmatprep.subr.bf16.mxu0 0
  %984 = vmatpush1.bf16.msra.mxu0 0
  %985 = vmatprep.subr.bf16.mxu0 0
  %986 = vmatpush1.bf16.msra.mxu0 0
  %987 = vmatprep.subr.bf16.mxu0 0
  %988 = vmatpush1.bf16.msra.mxu0 0
  %989 = vmatprep.mubr.bf16.mxu0 0
  %990 = vmatmul.mubr.bf16.gmra.mrb[0].mxu0 %v648
  %v991 = vpop.f32.mrb[0].mxu0
  %v992 = vadd.f32 0.0, %v991
  %v993 = vpop.f32.mrb[0].mxu0
  %v994 = vadd.f32 0.0, %v993
  %v995 = vpop.f32.mrb[0].mxu0
  %v996 = vadd.f32 0.0, %v995
  %v997 = vpop.f32.mrb[0].mxu0
  %v998 = vadd.f32 0.0, %v997
  %999 = vdwg.mxu0
  %1000 = vmatprep.subr.bf16.mxu0 %v453
  %1001 = vmatpush1.bf16.msra.mxu0 %v452
  %1002 = vmatprep.subr.bf16.mxu0 %v469
  %1003 = vmatpush1.bf16.msra.mxu0 %v468
  %1004 = vmatprep.subr.bf16.mxu0 %v485
  %1005 = vmatpush1.bf16.msra.mxu0 %v484
  %1006 = vmatprep.subr.bf16.mxu0 %v501
  %1007 = vmatpush1.bf16.msra.mxu0 %v500
  %1008 = vmatprep.subr.bf16.mxu0 %v517
  %1009 = vmatpush1.bf16.msra.mxu0 %v516
  %1010 = vmatprep.subr.bf16.mxu0 %v533
  %1011 = vmatpush1.bf16.msra.mxu0 %v532
  %1012 = vmatprep.subr.bf16.mxu0 %v697
  %1013 = vmatpush1.bf16.msra.mxu0 %v694
  %1014 = vmatprep.subr.bf16.mxu0 0
  %1015 = vmatpush1.bf16.msra.mxu0 0
  %1016 = vmatprep.subr.bf16.mxu0 0
  %1017 = vmatpush1.bf16.msra.mxu0 0
  %1018 = vmatprep.subr.bf16.mxu0 0
  %1019 = vmatpush1.bf16.msra.mxu0 0
  %1020 = vmatprep.subr.bf16.mxu0 0
  %1021 = vmatpush1.bf16.msra.mxu0 0
  %1022 = vmatprep.subr.bf16.mxu0 0
  %1023 = vmatpush1.bf16.msra.mxu0 0
  %1024 = vmatprep.subr.bf16.mxu0 0
  %1025 = vmatpush1.bf16.msra.mxu0 0
  %1026 = vmatprep.subr.bf16.mxu0 0
  %1027 = vmatpush1.bf16.msra.mxu0 0
  %1028 = vmatprep.subr.bf16.mxu0 0
  %1029 = vmatpush1.bf16.msra.mxu0 0
  %1030 = vmatprep.subr.bf16.mxu0 0
  %1031 = vmatpush1.bf16.msra.mxu0 0
  %1032 = vmatprep.mubr.bf16.mxu0 0
  %1033 = vmatmul.mubr.bf16.gmra.mrb[0].mxu0 %v648
  %v1034 = vpop.f32.mrb[0].mxu0
  %v1035 = vadd.f32 0.0, %v1034
  %v1036 = vpop.f32.mrb[0].mxu0
  %v1037 = vadd.f32 0.0, %v1036
  %v1038 = vpop.f32.mrb[0].mxu0
  %v1039 = vadd.f32 0.0, %v1038
  %v1040 = vpop.f32.mrb[0].mxu0
  %v1041 = vadd.f32 0.0, %v1040
  %1042 = vdwg.mxu0
  %v1043 = vmax.f32 %v734, %v820
  %v1044 = vmax.f32 %v736, %v822
  %v1045 = vmax.f32 %v777, %v863
  %v1046 = vmax.f32 %v779, %v865
  %v1047 = vmax.f32 %v738, %v824
  %v1048 = vmax.f32 %v740, %v826
  %v1049 = vmax.f32 %v781, %v867
  %v1050 = vmax.f32 %v783, %v869
  %v1051 = vmax.f32 %v906, %v992
  %v1052 = vmax.f32 %v908, %v994
  %v1053 = vmax.f32 %v949, %v1035
  %v1054 = vmax.f32 %v951, %v1037
  %v1055 = vmax.f32 %v910, %v996
  %v1056 = vmax.f32 %v912, %v998
  %v1057 = vmax.f32 %v953, %v1039
  %v1058 = vmax.f32 %v955, %v1041
  %v1059 = vmax.f32 %v1043, %v1051
  %v1060 = vmax.f32 %v1044, %v1052
  %v1061 = vmax.f32 %v1045, %v1053
  %v1062 = vmax.f32 %v1046, %v1054
  %v1063 = vmax.f32 %v1047, %v1055
  %v1064 = vmax.f32 %v1048, %v1056
  %v1065 = vmax.f32 %v1049, %v1057
  %v1066 = vmax.f32 %v1050, %v1058
  %v1067 = vld [vmem:[%s2] sm:$0xff]
  %v1068 = vld [vmem:[%s2 + $0x8] sm:$0x3]
  %1070 = vset.pattern.permute.xlu0 0
  %1071 = vperm.xlu0 %1070, %v1067
  %v1072 = vpop.permute.xlu0 %1071
  %1075 = vset.pattern.permute.xlu0 0
  %1076 = vperm.xlu0 %1075, %v1068
  %v1077 = vpop.permute.xlu0 %1076
  %v1079 = vadd.f32 %v1059, %v1072
  %v1080 = vadd.f32 %v1060, %v1072
  %v1081 = vadd.f32 %v1061, %v1072
  %v1082 = vadd.f32 %v1062, %v1072
  %v1083 = vadd.f32 %v1063, %v1077
  %v1084 = vadd.f32 %v1064, %v1077
  %v1085 = vadd.f32 %v1065, %v1077
  %v1086 = vadd.f32 %v1066, %v1077
  %v1087 = vmax.f32 %v1079, 0.0
  %v1088 = vmax.f32 %v1080, 0.0
  %v1089 = vmax.f32 %v1081, 0.0
  %v1090 = vmax.f32 %v1082, 0.0
  %v1091 = vmax.f32 %v1083, 0.0
  %v1092 = vmax.f32 %v1084, 0.0
  %v1093 = vmax.f32 %v1085, 0.0
  %v1094 = vmax.f32 %v1086, 0.0
  %v1095 = vpack.c.bf16 %v1091, %v1087
  %v1096 = vpack.c.bf16 %v1092, %v1088
  %v1097 = vpack.c.bf16 %v1093, %v1089
  %v1098 = vpack.c.bf16 %v1094, %v1090
  %v1103 = vunpack.c.l.b16 %v1095
  %v1104 = vunpack.c.l.b16 %v1096
  %v1105 = vunpack.c.l.b16 %v1097
  %v1106 = vunpack.c.l.b16 %v1098
  %v1107 = vunpack.c.h.b16 %v1095
  %v1108 = vunpack.c.h.b16 %v1096
  %v1109 = vunpack.c.h.b16 %v1097
  %v1110 = vunpack.c.h.b16 %v1098
  %v1111 = vpack.c.b16 %v1104, %v1103
  %v1112 = vpack.c.b16 %v1106, %v1105
  %v1113 = vpack.c.b16 %v1108, %v1107
  %v1114 = vpack.c.b16 %v1110, %v1109
  %1119 = vst [vmem:[%s3] sm:$0xff] %v1111
  %1120 = vst [vmem:[%s3 + $0x8] sm:$0xff] %v1112
  %1121 = vst [vmem:[%s3 + $0x10] sm:$0x11] %v1113
  %1122 = vst [vmem:[%s3 + $0x18] sm:$0x11] %v1114
  // Predicated region
  $region14: #{net_forward.2} parent=0 // pred_check
    _
  $region15: #{net_forward.2} parent=0 // pred_check_branch
    %1124 = sbr.rel (0) target = $region17
  $region16: #{net_forward.2} parent=0 // pred_region
    _
  $region17: #{net_forward.2} parent=0 // pred_fallthru
    _
  // Predicated region
  $region18: #{net_forward.2} parent=0 // pred_check
    _
  $region19: #{net_forward.2} parent=0 // pred_check_branch
    %1126 = sbr.rel (0) target = $region21
  $region20: #{net_forward.2} parent=0 // pred_region
    _
  $region21: #{net_forward.2} parent=0 // pred_fallthru
    _

// kernel: net_forward.3
$region0: #{net_forward.3}
  #allocation0 [shape = 'u32[]', space=smem, size = 0x4, offset = 0x4, fixed_abs, tag = 'smem constant byte address 0x4 - core index']
  #allocation1 [shape = 'u32[144,128]{1,0:T(1,128)}', space=vmem, size = 0x12000, scoped, tag = 'internal scratch']
  #allocation2 [shape = 'f32[2,500]{1,0:T(2,128)}', space=vmem, size = 0x1000, scoped, tag = 'scratch operand']
  %s0 = inlined_call_operand.vmem [shape: bf16[200,250], index: 0, kind: input, shape index: {}]
  %s1 = inlined_call_operand.vmem [shape: bf16[250,20], index: 1, kind: input, shape index: {}]
  %s2 = inlined_call_operand.vmem [shape: f32[1,20], index: 2, kind: input, shape index: {}]
  %s3 = inlined_call_operand.vmem [shape: bf16[500,40], index: 3, kind: input, shape index: {}]
  %s4 = inlined_call_operand.vmem [shape: f32[1,40], index: 4, kind: input, shape index: {}]
  %s5 = inlined_call_operand.vmem [shape: bf16[40,10], index: 5, kind: input, shape index: {}]
  %s6 = inlined_call_operand.vmem [shape: f32[1,10], index: 6, kind: input, shape index: {}]
  %s7 = inlined_call_operand.hbm [shape: f32[2,10], index: 7, kind: output, shape index: {}]
  %s8 = sld [smem:[#allocation0]]
  $region38: #{net_forward.3} parent=0
    _
  %s10 = ssub.s32 1, %s8
  %s11 = scalar_select 0, %s10, %s8
  $region1: #{net_forward.3} parent=0
    #allocation3 [shape = 'u8[1024]{0}', space=vmem, size = 0x400, scoped, tag = 'output window, operand 0, single buffered']
    #allocation4 [shape = 's32[1]{0}', space=sflag, size = 0x4, scoped, tag = 'scoped memory for net_forward.3']
    %12 = vsyncpa [#allocation4], 0
    // Predicated region
    $region2: #{net_forward.3} parent=1 // pred_check
      _
    $region3: #{net_forward.3} parent=1 // pred_check_branch
      %14 = sbr.rel (0) target = $region5
    $region4: #{net_forward.3} parent=1 // pred_region
      _
    $region5: #{net_forward.3} parent=1 // pred_fallthru
      _
    // Predicated region
    $region6: #{net_forward.3} parent=1 // pred_check
      _
    $region7: #{net_forward.3} parent=1 // pred_check_branch
      %16 = sbr.rel (0) target = $region9
    $region8: #{net_forward.3} parent=1 // pred_region
      _
    $region9: #{net_forward.3} parent=1 // pred_fallthru
      _
    // Predicated region
    $region10: #{net_forward.3} parent=1 // pred_check
      _
    $region11: #{net_forward.3} parent=1 // pred_check_branch
      %18 = sbr.rel (0) target = $region13
    $region12: #{net_forward.3} parent=1 // pred_region
      _
    $region13: #{net_forward.3} parent=1 // pred_fallthru
      _
    // Predicated region
    $region14: #{net_forward.3} parent=1 // pred_check
      _
    $region15: #{net_forward.3} parent=1 // pred_check_branch
      %20 = sbr.rel (0) target = $region17
    $region16: #{net_forward.3} parent=1 // pred_region
      _
    $region17: #{net_forward.3} parent=1 // pred_fallthru
      _
    // Predicated region
    $region18: #{net_forward.3} parent=1 // pred_check
      _
    $region19: #{net_forward.3} parent=1 // pred_check_branch
      %22 = sbr.rel (0) target = $region21
    $region20: #{net_forward.3} parent=1 // pred_region
      _
    $region21: #{net_forward.3} parent=1 // pred_fallthru
      _
    // Predicated region
    $region22: #{net_forward.3} parent=1 // pred_check
      _
    $region23: #{net_forward.3} parent=1 // pred_check_branch
      %24 = sbr.rel (0) target = $region25
    $region24: #{net_forward.3} parent=1 // pred_region
      _
    $region25: #{net_forward.3} parent=1 // pred_fallthru
      _
    // Predicated region
    $region26: #{net_forward.3} parent=1 // pred_check
      _
    $region27: #{net_forward.3} parent=1 // pred_check_branch
      %26 = sbr.rel (0) target = $region29
    $region28: #{net_forward.3} parent=1 // pred_region
      _
    $region29: #{net_forward.3} parent=1 // pred_fallthru
      _
    %v28 = vld [vmem:[%s0] sm:$0xff]
    %v29 = vld [vmem:[%s0 + $0x8] sm:$0xff]
    %v30 = vld [vmem:[%s0 + $0x10] sm:$0xff]
    %v31 = vld [vmem:[%s0 + $0x18] sm:$0xff]
    %v32 = vld [vmem:[%s0 + $0x20] sm:$0xff]
    %v33 = vld [vmem:[%s0 + $0x28] sm:$0xff]
    %v34 = vld [vmem:[%s0 + $0x30] sm:$0xff]
    %v35 = vld [vmem:[%s0 + $0x38] sm:$0xff]
    %v36 = vld [vmem:[%s0 + $0x40] sm:$0xff]
    %v37 = vld [vmem:[%s0 + $0x48] sm:$0xff]
    %v38 = vld [vmem:[%s0 + $0x50] sm:$0xff]
    %v39 = vld [vmem:[%s0 + $0x58] sm:$0xff]
    %v40 = vld [vmem:[%s0 + $0x60] sm:$0xff]
    %v41 = vld [vmem:[%s0 + $0x68] sm:$0xff]
    %v42 = vld [vmem:[%s0 + $0x70] sm:$0xff]
    %v43 = vld [vmem:[%s0 + $0x78] sm:$0xff]
    %v44 = vld [vmem:[%s0 + $0x80] sm:$0xff]
    %v45 = vld [vmem:[%s0 + $0x88] sm:$0xff]
    %v46 = vld [vmem:[%s0 + $0x90] sm:$0xff]
    %v47 = vld [vmem:[%s0 + $0x98] sm:$0xff]
    %v48 = vld [vmem:[%s0 + $0xa0] sm:$0xff]
    %v49 = vld [vmem:[%s0 + $0xa8] sm:$0xff]
    %v50 = vld [vmem:[%s0 + $0xb0] sm:$0xff]
    %v51 = vld [vmem:[%s0 + $0xb8] sm:$0xff]
    %v52 = vld [vmem:[%s0 + $0xc0] sm:$0xff]
    %v53 = vld [vmem:[%s1] sm:$0xf]
    %v54 = vld [vmem:[%s1 + $0x4] sm:$0xf]
    %v55 = vld [vmem:[%s1 + $0x8] sm:$0xf]
    %v56 = vld [vmem:[%s1 + $0xc] sm:$0xf]
    %v57 = vld [vmem:[%s1 + $0x10] sm:$0xf]
    %v58 = vld [vmem:[%s1 + $0x14] sm:$0xf]
    %v59 = vld [vmem:[%s1 + $0x18] sm:$0xf]
    %v60 = vld [vmem:[%s1 + $0x1c] sm:$0xf]
    %v61 = vld [vmem:[%s1 + $0x20] sm:$0xf]
    %v62 = vld [vmem:[%s1 + $0x24] sm:$0xf]
    %v63 = vld [vmem:[%s1 + $0x28] sm:$0xf]
    %v64 = vld [vmem:[%s1 + $0x2c] sm:$0xf]
    %v65 = vld [vmem:[%s1 + $0x30] sm:$0xf]
    %v66 = vld [vmem:[%s1 + $0x34] sm:$0xf]
    %v67 = vld [vmem:[%s1 + $0x38] sm:$0xf]
    %v68 = vld [vmem:[%s1 + $0x3c] sm:$0xf]
    %v69 = vld [vmem:[%s1 + $0x40] sm:$0xf]
    %v70 = vld [vmem:[%s1 + $0x44] sm:$0xf]
    %v71 = vld [vmem:[%s1 + $0x48] sm:$0xf]
    %v72 = vld [vmem:[%s1 + $0x4c] sm:$0xf]
    %v73 = vld [vmem:[%s1 + $0x50] sm:$0xf]
    %v74 = vld [vmem:[%s1 + $0x54] sm:$0xf]
    %v75 = vld [vmem:[%s1 + $0x58] sm:$0xf]
    %v76 = vld [vmem:[%s1 + $0x5c] sm:$0xf]
    %v77 = vld [vmem:[%s1 + $0x60] sm:$0xf]
    %v78 = vld [vmem:[%s1 + $0x64] sm:$0xf]
    %v79 = vld [vmem:[%s1 + $0x68] sm:$0xf]
    %v80 = vld [vmem:[%s1 + $0x6c] sm:$0xf]
    %v81 = vld [vmem:[%s1 + $0x70] sm:$0xf]
    %v82 = vld [vmem:[%s1 + $0x74] sm:$0xf]
    %v83 = vld [vmem:[%s1 + $0x78] sm:$0xf]
    %v84 = vld [vmem:[%s1 + $0x7c] sm:$0x1]
    %v110 = vunpack.c.l.b16 %v28
    %v111 = vunpack.c.h.b16 %v28
    %v112 = vunpack.c.l.b16 %v29
    %v113 = vunpack.c.h.b16 %v29
    %v114 = vunpack.c.l.b16 %v30
    %v115 = vunpack.c.h.b16 %v30
    %v116 = vunpack.c.l.b16 %v31
    %v117 = vunpack.c.h.b16 %v31
    %v118 = vunpack.c.l.b16 %v32
    %v119 = vunpack.c.h.b16 %v32
    %v120 = vunpack.c.l.b16 %v33
    %v121 = vunpack.c.h.b16 %v33
    %v122 = vunpack.c.l.b16 %v34
    %v123 = vunpack.c.h.b16 %v34
    %v124 = vunpack.c.l.b16 %v35
    %v125 = vunpack.c.h.b16 %v35
    %v126 = vunpack.c.l.b16 %v36
    %v127 = vunpack.c.h.b16 %v36
    %v128 = vunpack.c.l.b16 %v37
    %v129 = vunpack.c.h.b16 %v37
    %v130 = vunpack.c.l.b16 %v38
    %v131 = vunpack.c.h.b16 %v38
    %v132 = vunpack.c.l.b16 %v39
    %v133 = vunpack.c.h.b16 %v39
    %v134 = vunpack.c.l.b16 %v40
    %v135 = vunpack.c.h.b16 %v40
    %v136 = vunpack.c.l.b16 %v41
    %v137 = vunpack.c.h.b16 %v41
    %v138 = vunpack.c.l.b16 %v42
    %v139 = vunpack.c.h.b16 %v42
    %v140 = vunpack.c.l.b16 %v43
    %v141 = vunpack.c.h.b16 %v43
    %v142 = vunpack.c.l.b16 %v44
    %v143 = vunpack.c.h.b16 %v44
    %v144 = vunpack.c.l.b16 %v45
    %v145 = vunpack.c.h.b16 %v45
    %v146 = vunpack.c.l.b16 %v46
    %v147 = vunpack.c.h.b16 %v46
    %v148 = vunpack.c.l.b16 %v47
    %v149 = vunpack.c.h.b16 %v47
    %v150 = vunpack.c.l.b16 %v48
    %v151 = vunpack.c.h.b16 %v48
    %v152 = vunpack.c.l.b16 %v49
    %v153 = vunpack.c.h.b16 %v49
    %v154 = vunpack.c.l.b16 %v50
    %v155 = vunpack.c.h.b16 %v50
    %v156 = vunpack.c.l.b16 %v51
    %v157 = vunpack.c.h.b16 %v51
    %v158 = vunpack.c.l.b16 %v52
    %v159 = vunpack.c.h.b16 %v52
    %v160 = vpack.c.b16 %v112, %v110
    %v161 = vpack.c.b16 %v113, %v111
    %v162 = vpack.c.b16 %v116, %v114
    %v163 = vpack.c.b16 %v117, %v115
    %v164 = vpack.c.b16 %v120, %v118
    %v165 = vpack.c.b16 %v121, %v119
    %v166 = vpack.c.b16 %v124, %v122
    %v167 = vpack.c.b16 %v125, %v123
    %v168 = vpack.c.b16 %v128, %v126
    %v169 = vpack.c.b16 %v129, %v127
    %v170 = vpack.c.b16 %v132, %v130
    %v171 = vpack.c.b16 %v133, %v131
    %v172 = vpack.c.b16 %v136, %v134
    %v173 = vpack.c.b16 %v137, %v135
    %v174 = vpack.c.b16 %v140, %v138
    %v175 = vpack.c.b16 %v141, %v139
    %v176 = vpack.c.b16 %v144, %v142
    %v177 = vpack.c.b16 %v145, %v143
    %v178 = vpack.c.b16 %v148, %v146
    %v179 = vpack.c.b16 %v149, %v147
    %v180 = vpack.c.b16 %v152, %v150
    %v181 = vpack.c.b16 %v153, %v151
    %v182 = vpack.c.b16 %v156, %v154
    %v183 = vpack.c.b16 %v157, %v155
    %v184 = vpack.c.b16 %v158, %v158
    %v185 = vpack.c.b16 %v159, %v159
    %v231 = vunpack.c.l.b16 %v53
    %v232 = vunpack.c.l.b16 %v54
    %v233 = vunpack.c.l.b16 %v55
    %v234 = vunpack.c.l.b16 %v56
    %v235 = vunpack.c.l.b16 %v57
    %v236 = vunpack.c.l.b16 %v58
    %v237 = vunpack.c.l.b16 %v59
    %v238 = vunpack.c.l.b16 %v60
    %v239 = vunpack.c.l.b16 %v61
    %v240 = vunpack.c.l.b16 %v62
    %v241 = vunpack.c.l.b16 %v63
    %v242 = vunpack.c.l.b16 %v64
    %v243 = vunpack.c.l.b16 %v65
    %v244 = vunpack.c.l.b16 %v66
    %v245 = vunpack.c.l.b16 %v67
    %v246 = vunpack.c.l.b16 %v68
    %v247 = vunpack.c.l.b16 %v69
    %v248 = vunpack.c.l.b16 %v70
    %v249 = vunpack.c.l.b16 %v71
    %v250 = vunpack.c.l.b16 %v72
    %v251 = vunpack.c.l.b16 %v73
    %v252 = vunpack.c.l.b16 %v74
    %v253 = vunpack.c.l.b16 %v75
    %v254 = vunpack.c.l.b16 %v76
    %v255 = vunpack.c.l.b16 %v77
    %v256 = vunpack.c.l.b16 %v78
    %v257 = vunpack.c.l.b16 %v79
    %v258 = vunpack.c.l.b16 %v80
    %v259 = vunpack.c.l.b16 %v81
    %v260 = vunpack.c.l.b16 %v82
    %v261 = vunpack.c.l.b16 %v83
    %v262 = vunpack.c.l.b16 %v84
    %v263 = vpack.c.b16 %v232, %v231
    %v264 = vpack.c.b16 %v234, %v233
    %v265 = vpack.c.b16 %v236, %v235
    %v266 = vpack.c.b16 %v238, %v237
    %v267 = vpack.c.b16 %v240, %v239
    %v268 = vpack.c.b16 %v242, %v241
    %v269 = vpack.c.b16 %v244, %v243
    %v270 = vpack.c.b16 %v246, %v245
    %v271 = vpack.c.b16 %v248, %v247
    %v272 = vpack.c.b16 %v250, %v249
    %v273 = vpack.c.b16 %v252, %v251
    %v274 = vpack.c.b16 %v254, %v253
    %v275 = vpack.c.b16 %v256, %v255
    %v276 = vpack.c.b16 %v258, %v257
    %v277 = vpack.c.b16 %v260, %v259
    %v278 = vpack.c.b16 %v262, %v261
    %vm294 = vcmask 998400
    %v296 = vsel %vm294, %v161, 0
    %v299 = vsel %vm294, %v163, 0
    %v302 = vsel %vm294, %v165, 0
    %v305 = vsel %vm294, %v167, 0
    %v308 = vsel %vm294, %v169, 0
    %v311 = vsel %vm294, %v171, 0
    %v314 = vsel %vm294, %v173, 0
    %v317 = vsel %vm294, %v175, 0
    %v320 = vsel %vm294, %v177, 0
    %v323 = vsel %vm294, %v179, 0
    %v326 = vsel %vm294, %v181, 0
    %v329 = vsel %vm294, %v183, 0
    %v332 = vsel %vm294, %v185, 0
    %vm334 = vcmask 1044480
    %v336 = vsel %vm334, %v278, 0
    %338 = vmatprep.subr.bf16.mxu0 0
    %339 = vmatpush1.bf16.msra.mxu0 %v263
    %340 = vmatprep.subr.bf16.mxu0 0
    %341 = vmatpush1.bf16.msra.mxu0 %v264
    %342 = vmatprep.subr.bf16.mxu0 0
    %343 = vmatpush1.bf16.msra.mxu0 %v265
    %344 = vmatprep.subr.bf16.mxu0 0
    %345 = vmatpush1.bf16.msra.mxu0 %v266
    %346 = vmatprep.subr.bf16.mxu0 0
    %347 = vmatpush1.bf16.msra.mxu0 %v267
    %348 = vmatprep.subr.bf16.mxu0 0
    %349 = vmatpush1.bf16.msra.mxu0 %v268
    %350 = vmatprep.subr.bf16.mxu0 0
    %351 = vmatpush1.bf16.msra.mxu0 %v269
    %352 = vmatprep.subr.bf16.mxu0 0
    %353 = vmatpush1.bf16.msra.mxu0 %v270
    %354 = vmatprep.subr.bf16.mxu0 0
    %355 = vmatpush1.bf16.msra.mxu0 %v271
    %356 = vmatprep.subr.bf16.mxu0 0
    %357 = vmatpush1.bf16.msra.mxu0 %v272
    %358 = vmatprep.subr.bf16.mxu0 0
    %359 = vmatpush1.bf16.msra.mxu0 %v273
    %360 = vmatprep.subr.bf16.mxu0 0
    %361 = vmatpush1.bf16.msra.mxu0 %v274
    %362 = vmatprep.subr.bf16.mxu0 0
    %363 = vmatpush1.bf16.msra.mxu0 %v275
    %364 = vmatprep.subr.bf16.mxu0 0
    %365 = vmatpush1.bf16.msra.mxu0 %v276
    %366 = vmatprep.subr.bf16.mxu0 0
    %367 = vmatpush1.bf16.msra.mxu0 %v277
    %368 = vmatprep.subr.bf16.mxu0 0
    %369 = vmatpush1.bf16.msra.mxu0 %v336
    %370 = vmatprep.mubr.bf16.mxu0 %v296
    %371 = vmatmul.mubr.bf16.gmra.mrb[0].mxu0 %v160
    %v372 = vpop.f32.mrb[0].mxu0
    %v373 = vadd.f32 0.0, %v372
    %v374 = vpop.f32.mrb[0].mxu0
    %v375 = vpop.f32.mrb[0].mxu0
    %v376 = vadd.f32 0.0, %v375
    %v377 = vpop.f32.mrb[0].mxu0
    %378 = vmatprep.mubr.bf16.mxu0 %v299
    %379 = vmatmul.mubr.bf16.gmra.mrb[0].mxu0 %v162
    %v380 = vpop.f32.mrb[0].mxu0
    %v381 = vadd.f32 0.0, %v380
    %v382 = vpop.f32.mrb[0].mxu0
    %v383 = vpop.f32.mrb[0].mxu0
    %v384 = vadd.f32 0.0, %v383
    %v385 = vpop.f32.mrb[0].mxu0
    %386 = vmatprep.mubr.bf16.mxu0 %v302
    %387 = vmatmul.mubr.bf16.gmra.mrb[0].mxu0 %v164
    %v388 = vpop.f32.mrb[0].mxu0
    %v389 = vadd.f32 0.0, %v388
    %v390 = vpop.f32.mrb[0].mxu0
    %v391 = vpop.f32.mrb[0].mxu0
    %v392 = vadd.f32 0.0, %v391
    %v393 = vpop.f32.mrb[0].mxu0
    %394 = vmatprep.mubr.bf16.mxu0 %v305
    %395 = vmatmul.mubr.bf16.gmra.mrb[0].mxu0 %v166
    %v396 = vpop.f32.mrb[0].mxu0
    %v397 = vadd.f32 0.0, %v396
    %v398 = vpop.f32.mrb[0].mxu0
    %v399 = vpop.f32.mrb[0].mxu0
    %v400 = vadd.f32 0.0, %v399
    %v401 = vpop.f32.mrb[0].mxu0
    %402 = vmatprep.mubr.bf16.mxu0 %v308
    %403 = vmatmul.mubr.bf16.gmra.mrb[0].mxu0 %v168
    %v404 = vpop.f32.mrb[0].mxu0
    %v405 = vadd.f32 0.0, %v404
    %v406 = vpop.f32.mrb[0].mxu0
    %v407 = vpop.f32.mrb[0].mxu0
    %v408 = vadd.f32 0.0, %v407
    %v409 = vpop.f32.mrb[0].mxu0
    %410 = vmatprep.mubr.bf16.mxu0 %v311
    %411 = vmatmul.mubr.bf16.gmra.mrb[0].mxu0 %v170
    %v412 = vpop.f32.mrb[0].mxu0
    %v413 = vadd.f32 0.0, %v412
    %v414 = vpop.f32.mrb[0].mxu0
    %v415 = vpop.f32.mrb[0].mxu0
    %v416 = vadd.f32 0.0, %v415
    %v417 = vpop.f32.mrb[0].mxu0
    %418 = vmatprep.mubr.bf16.mxu0 %v314
    %419 = vmatmul.mubr.bf16.gmra.mrb[0].mxu0 %v172
    %v420 = vpop.f32.mrb[0].mxu0
    %v421 = vadd.f32 0.0, %v420
    %v422 = vpop.f32.mrb[0].mxu0
    %v423 = vpop.f32.mrb[0].mxu0
    %v424 = vadd.f32 0.0, %v423
    %v425 = vpop.f32.mrb[0].mxu0
    %426 = vmatprep.mubr.bf16.mxu0 %v317
    %427 = vmatmul.mubr.bf16.gmra.mrb[0].mxu0 %v174
    %v428 = vpop.f32.mrb[0].mxu0
    %v429 = vadd.f32 0.0, %v428
    %v430 = vpop.f32.mrb[0].mxu0
    %v431 = vpop.f32.mrb[0].mxu0
    %v432 = vadd.f32 0.0, %v431
    %v433 = vpop.f32.mrb[0].mxu0
    %434 = vmatprep.mubr.bf16.mxu0 %v320
    %435 = vmatmul.mubr.bf16.gmra.mrb[0].mxu0 %v176
    %v436 = vpop.f32.mrb[0].mxu0
    %v437 = vadd.f32 0.0, %v436
    %v438 = vpop.f32.mrb[0].mxu0
    %v439 = vpop.f32.mrb[0].mxu0
    %v440 = vadd.f32 0.0, %v439
    %v441 = vpop.f32.mrb[0].mxu0
    %442 = vmatprep.mubr.bf16.mxu0 %v323
    %443 = vmatmul.mubr.bf16.gmra.mrb[0].mxu0 %v178
    %v444 = vpop.f32.mrb[0].mxu0
    %v445 = vadd.f32 0.0, %v444
    %v446 = vpop.f32.mrb[0].mxu0
    %v447 = vpop.f32.mrb[0].mxu0
    %v448 = vadd.f32 0.0, %v447
    %v449 = vpop.f32.mrb[0].mxu0
    %450 = vmatprep.mubr.bf16.mxu0 %v326
    %451 = vmatmul.mubr.bf16.gmra.mrb[0].mxu0 %v180
    %v452 = vpop.f32.mrb[0].mxu0
    %v453 = vadd.f32 0.0, %v452
    %v454 = vpop.f32.mrb[0].mxu0
    %v455 = vpop.f32.mrb[0].mxu0
    %v456 = vadd.f32 0.0, %v455
    %v457 = vpop.f32.mrb[0].mxu0
    %458 = vmatprep.mubr.bf16.mxu0 %v329
    %459 = vmatmul.mubr.bf16.gmra.mrb[0].mxu0 %v182
    %v460 = vpop.f32.mrb[0].mxu0
    %v461 = vadd.f32 0.0, %v460
    %v462 = vpop.f32.mrb[0].mxu0
    %v463 = vpop.f32.mrb[0].mxu0
    %v464 = vadd.f32 0.0, %v463
    %v465 = vpop.f32.mrb[0].mxu0
    %466 = vmatprep.mubr.bf16.mxu0 %v332
    %467 = vmatmul.mubr.bf16.gmra.mrb[0].mxu0 %v184
    %v468 = vpop.f32.mrb[0].mxu0
    %v469 = vadd.f32 0.0, %v468
    %v470 = vpop.f32.mrb[0].mxu0
    %v471 = vpop.f32.mrb[0].mxu0
    %v472 = vpop.f32.mrb[0].mxu0
    %473 = vdwg.mxu0
    %vm481 = vcmask 1045504
    %v482 = vrot.slane %v397, 2
    %v483 = vrot.slane %v400, 2
    %v484 = vsel %vm481, %v482, %v483
    %v485 = vrot.slane %v405, 2
    %v486 = vsel %vm481, %v483, %v485
    %v487 = vrot.slane %v408, 2
    %v488 = vsel %vm481, %v485, %v487
    %v489 = vrot.slane %v413, 2
    %v490 = vsel %vm481, %v487, %v489
    %v491 = vrot.slane %v416, 2
    %v492 = vsel %vm481, %v489, %v491
    %v493 = vrot.slane %v421, 2
    %v494 = vsel %vm481, %v491, %v493
    %v502 = vmax.f32 %v373, %v484
    %v503 = vmax.f32 %v376, %v486
    %v504 = vmax.f32 %v381, %v488
    %v505 = vmax.f32 %v384, %v490
    %v506 = vmax.f32 %v389, %v492
    %v507 = vmax.f32 %v392, %v494
    %v508 = vmax.f32 %v397, %v493
    %v516 = vrot.slane %v445, 2
    %v517 = vrot.slane %v448, 2
    %v518 = vsel %vm481, %v516, %v517
    %v519 = vrot.slane %v453, 2
    %v520 = vsel %vm481, %v517, %v519
    %v521 = vrot.slane %v456, 2
    %v522 = vsel %vm481, %v519, %v521
    %v523 = vrot.slane %v461, 2
    %v524 = vsel %vm481, %v521, %v523
    %v525 = vrot.slane %v464, 2
    %v526 = vsel %vm481, %v523, %v525
    %v527 = vrot.slane %v469, 2
    %v528 = vsel %vm481, %v525, %v527
    %v536 = vmax.f32 %v421, %v518
    %v537 = vmax.f32 %v424, %v520
    %v538 = vmax.f32 %v429, %v522
    %v539 = vmax.f32 %v432, %v524
    %v540 = vmax.f32 %v437, %v526
    %v541 = vmax.f32 %v440, %v528
    %v542 = vmax.f32 %v445, %v527
    %vm550 = vcmask 1043456
    %v551 = vrot.slane %v536, 4
    %v552 = vrot.slane %v537, 4
    %v553 = vsel %vm550, %v551, %v552
    %v554 = vrot.slane %v538, 4
    %v555 = vsel %vm550, %v552, %v554
    %v556 = vrot.slane %v539, 4
    %v557 = vsel %vm550, %v554, %v556
    %v558 = vrot.slane %v540, 4
    %v559 = vsel %vm550, %v556, %v558
    %v560 = vrot.slane %v541, 4
    %v561 = vsel %vm550, %v558, %v560
    %v562 = vrot.slane %v542, 4
    %v563 = vsel %vm550, %v560, %v562
    %v571 = vmax.f32 %v502, %v553
    %v572 = vmax.f32 %v503, %v555
    %v573 = vmax.f32 %v504, %v557
    %v574 = vmax.f32 %v505, %v559
    %v575 = vmax.f32 %v506, %v561
    %v576 = vmax.f32 %v507, %v563
    %v577 = vmax.f32 %v508, %v562
    %v578 = vld [vmem:[%s2] sm:$0x1]
    %v580 = vlaneseq
    %v581 = vshrl.u32 %v580, 7
    %v582 = vsub.s32 0, %v581
    %v583 = vrot.slane %v578, %v582
    %v585 = vadd.f32 %v571, %v583
    %v586 = vadd.f32 %v572, %v583
    %v587 = vadd.f32 %v573, %v583
    %v588 = vadd.f32 %v574, %v583
    %v589 = vadd.f32 %v575, %v583
    %v590 = vadd.f32 %v576, %v583
    %v591 = vadd.f32 %v577, %v583
    %v592 = vmax.f32 %v585, 0.0
    %v593 = vmax.f32 %v586, 0.0
    %v594 = vmax.f32 %v587, 0.0
    %v595 = vmax.f32 %v588, 0.0
    %v596 = vmax.f32 %v589, 0.0
    %v597 = vmax.f32 %v590, 0.0
    %v598 = vmax.f32 %v591, 0.0
    %vm599 = vcmask 156672
    %600 = vst.msk [vmem:[#allocation2] sm:$0x3] %vm599, %v592
    %v603 = vunpack.c.l.s4 1983009808
    %v604 = vunpack.c.0.s8 %v603
    %v605 = vlaneseq
    %v606 = vshrl.u32 %v605, 7
    %v607 = vsub.s32 %v604, %v606
    %v608 = vrot.slane %v592, %v607
    %v609 = vcombine.high %v608, %v608
    %610 = vrot.lane.b32.xlu0 %v609, 20
    %v611 = vpop.permute.xlu0 %610
    %vm613 = vcmask 320672
    %614 = vst.msk [vmem:[#allocation2] sm:$0x3] %vm613, %v611
    %v615 = vcombine.high %v592, %v592
    %v617 = vunpack.c.l.s4 1983009808
    %v618 = vunpack.c.0.s8 %v617
    %v619 = vlaneseq
    %v620 = vshrl.u32 %v619, 7
    %v621 = vsub.s32 %v618, %v620
    %v622 = vrot.slane %v615, %v621
    %623 = vrot.lane.b32.xlu0 %v622, 40
    %v624 = vpop.permute.xlu0 %623
    %vm626 = vcmask 484672
    %627 = vst.msk [vmem:[#allocation2] sm:$0x3] %vm626, %v624
    %v628 = vcombine.high %v622, %v622
    %629 = vrot.lane.b32.xlu0 %v628, 60
    %v630 = vpop.permute.xlu0 %629
    %vm632 = vcmask 648672
    %633 = vst.msk [vmem:[#allocation2] sm:$0x3] %vm632, %v630
    %v636 = vunpack.c.l.s4 1983009808
    %v637 = vunpack.c.0.s8 %v636
    %v638 = vlaneseq
    %v639 = vshrl.u32 %v638, 7
    %v640 = vsub.s32 %v637, %v639
    %v641 = vrot.slane %v593, %v640
    %642 = vrot.lane.b32.xlu0 %v641, 80
    %v643 = vpop.permute.xlu0 %642
    %vm645 = vcmask 812672
    %646 = vst.msk [vmem:[#allocation2] sm:$0x3] %vm645, %v643
    %v647 = vcombine.high %v641, %v641
    %648 = vrot.lane.b32.xlu0 %v647, 100
    %v649 = vpop.permute.xlu0 %648
    %vm651 = vcmask 976672
    %652 = vst.msk [vmem:[#allocation2] sm:$0x3] %vm651, %v649
    %v653 = vcombine.high %v593, %v593
    %v655 = vunpack.c.l.s4 1983009808
    %v656 = vunpack.c.0.s8 %v655
    %v657 = vlaneseq
    %v658 = vshrl.u32 %v657, 7
    %v659 = vsub.s32 %v656, %v658
    %v660 = vrot.slane %v653, %v659
    %661 = vrot.lane.b32.xlu0 %v660, 120
    %v662 = vpop.permute.xlu0 %661
    %v663 = vrot.slane %v662, 6
    %vm664 = vcmask 982016
    %v665 = vsel %vm664, %v663, %v662
    %vm667 = vcmask 1042368
    %vm668 = vcmask 93186
    %vm669 = vmor %vm668, %vm667
    %670 = vst.msk [vmem:[#allocation2] sm:$0xf] %vm669, %v665
    %v671 = vcombine.high %v660, %v660
    %672 = vrot.lane.b32.xlu0 %v671, 12
    %v673 = vpop.permute.xlu0 %672
    %vm675 = vcmask 255072
    %676 = vst.msk [vmem:[#allocation2 + $0x2] sm:$0x3] %vm675, %v673
    %v679 = vunpack.c.l.s4 1983009808
    %v680 = vunpack.c.0.s8 %v679
    %v681 = vlaneseq
    %v682 = vshrl.u32 %v681, 7
    %v683 = vsub.s32 %v680, %v682
    %v684 = vrot.slane %v594, %v683
    %685 = vrot.lane.b32.xlu0 %v684, 32
    %v686 = vpop.permute.xlu0 %685
    %vm688 = vcmask 419072
    %689 = vst.msk [vmem:[#allocation2 + $0x2] sm:$0x3] %vm688, %v686
    %v690 = vcombine.high %v684, %v684
    %691 = vrot.lane.b32.xlu0 %v690, 52
    %v692 = vpop.permute.xlu0 %691
    %vm694 = vcmask 583072
    %695 = vst.msk [vmem:[#allocation2 + $0x2] sm:$0x3] %vm694, %v692
    %v696 = vcombine.high %v594, %v594
    %v698 = vunpack.c.l.s4 1983009808
    %v699 = vunpack.c.0.s8 %v698
    %v700 = vlaneseq
    %v701 = vshrl.u32 %v700, 7
    %v702 = vsub.s32 %v699, %v701
    %v703 = vrot.slane %v696, %v702
    %704 = vrot.lane.b32.xlu0 %v703, 72
    %v705 = vpop.permute.xlu0 %704
    %vm707 = vcmask 747072
    %708 = vst.msk [vmem:[#allocation2 + $0x2] sm:$0x3] %vm707, %v705
    %v709 = vcombine.high %v703, %v703
    %710 = vrot.lane.b32.xlu0 %v709, 92
    %v711 = vpop.permute.xlu0 %710
    %vm713 = vcmask 911072
    %714 = vst.msk [vmem:[#allocation2 + $0x2] sm:$0x3] %vm713, %v711
    %v717 = vunpack.c.l.s4 1983009808
    %v718 = vunpack.c.0.s8 %v717
    %v719 = vlaneseq
    %v720 = vshrl.u32 %v719, 7
    %v721 = vsub.s32 %v718, %v720
    %v722 = vrot.slane %v595, %v721
    %723 = vrot.lane.b32.xlu0 %v722, 112
    %v724 = vpop.permute.xlu0 %723
    %v725 = vrot.slane %v724, 6
    %vm726 = vcmask 916480
    %v727 = vsel %vm726, %v725, %v724
    %vm729 = vcmask 1042304
    %vm730 = vcmask 27650
    %vm731 = vmor %vm730, %vm729
    %732 = vst.msk [vmem:[#allocation2 + $0x2] sm:$0xf] %vm731, %v727
    %v733 = vcombine.high %v722, %v722
    %734 = vrot.lane.b32.xlu0 %v733, 4
    %v735 = vpop.permute.xlu0 %734
    %vm737 = vcmask 189472
    %738 = vst.msk [vmem:[#allocation2 + $0x4] sm:$0x3] %vm737, %v735
    %v739 = vcombine.high %v595, %v595
    %v741 = vunpack.c.l.s4 1983009808
    %v742 = vunpack.c.0.s8 %v741
    %v743 = vlaneseq
    %v744 = vshrl.u32 %v743, 7
    %v745 = vsub.s32 %v742, %v744
    %v746 = vrot.slane %v739, %v745
    %747 = vrot.lane.b32.xlu0 %v746, 24
    %v748 = vpop.permute.xlu0 %747
    %vm750 = vcmask 353472
    %751 = vst.msk [vmem:[#allocation2 + $0x4] sm:$0x3] %vm750, %v748
    %v752 = vcombine.high %v746, %v746
    %753 = vrot.lane.b32.xlu0 %v752, 44
    %v754 = vpop.permute.xlu0 %753
    %vm756 = vcmask 517472
    %757 = vst.msk [vmem:[#allocation2 + $0x4] sm:$0x3] %vm756, %v754
    %v760 = vunpack.c.l.s4 1983009808
    %v761 = vunpack.c.0.s8 %v760
    %v762 = vlaneseq
    %v763 = vshrl.u32 %v762, 7
    %v764 = vsub.s32 %v761, %v763
    %v765 = vrot.slane %v596, %v764
    %766 = vrot.lane.b32.xlu0 %v765, 64
    %v767 = vpop.permute.xlu0 %766
    %vm769 = vcmask 681472
    %770 = vst.msk [vmem:[#allocation2 + $0x4] sm:$0x3] %vm769, %v767
    %v771 = vcombine.high %v765, %v765
    %772 = vrot.lane.b32.xlu0 %v771, 84
    %v773 = vpop.permute.xlu0 %772
    %vm775 = vcmask 845472
    %776 = vst.msk [vmem:[#allocation2 + $0x4] sm:$0x3] %vm775, %v773
    %v777 = vcombine.high %v596, %v596
    %v779 = vunpack.c.l.s4 1983009808
    %v780 = vunpack.c.0.s8 %v779
    %v781 = vlaneseq
    %v782 = vshrl.u32 %v781, 7
    %v783 = vsub.s32 %v780, %v782
    %v784 = vrot.slane %v777, %v783
    %785 = vrot.lane.b32.xlu0 %v784, 104
    %v786 = vpop.permute.xlu0 %785
    %vm788 = vcmask 1009472
    %789 = vst.msk [vmem:[#allocation2 + $0x4] sm:$0x3] %vm788, %v786
    %v790 = vcombine.high %v784, %v784
    %791 = vrot.lane.b32.xlu0 %v790, 124
    %v792 = vpop.permute.xlu0 %791
    %v793 = vrot.slane %v792, 6
    %vm794 = vcmask 1014784
    %v795 = vsel %vm794, %v793, %v792
    %vm797 = vcmask 1042400
    %vm798 = vcmask 125954
    %vm799 = vmor %vm798, %vm797
    %800 = vst.msk [vmem:[#allocation2 + $0x4] sm:$0xf] %vm799, %v795
    %v803 = vunpack.c.l.s4 1983009808
    %v804 = vunpack.c.0.s8 %v803
    %v805 = vlaneseq
    %v806 = vshrl.u32 %v805, 7
    %v807 = vsub.s32 %v804, %v806
    %v808 = vrot.slane %v597, %v807
    %809 = vrot.lane.b32.xlu0 %v808, 16
    %v810 = vpop.permute.xlu0 %809
    %vm812 = vcmask 287872
    %813 = vst.msk [vmem:[#allocation2 + $0x6] sm:$0x3] %vm812, %v810
    %v814 = vcombine.high %v808, %v808
    %815 = vrot.lane.b32.xlu0 %v814, 36
    %v816 = vpop.permute.xlu0 %815
    %vm818 = vcmask 451872
    %819 = vst.msk [vmem:[#allocation2 + $0x6] sm:$0x3] %vm818, %v816
    %v820 = vcombine.high %v597, %v597
    %v822 = vunpack.c.l.s4 1983009808
    %v823 = vunpack.c.0.s8 %v822
    %v824 = vlaneseq
    %v825 = vshrl.u32 %v824, 7
    %v826 = vsub.s32 %v823, %v825
    %v827 = vrot.slane %v820, %v826
    %828 = vrot.lane.b32.xlu0 %v827, 56
    %v829 = vpop.permute.xlu0 %828
    %vm831 = vcmask 615872
    %832 = vst.msk [vmem:[#allocation2 + $0x6] sm:$0x3] %vm831, %v829
    %v833 = vcombine.high %v827, %v827
    %834 = vrot.lane.b32.xlu0 %v833, 76
    %v835 = vpop.permute.xlu0 %834
    %vm837 = vcmask 779872
    %838 = vst.msk [vmem:[#allocation2 + $0x6] sm:$0x3] %vm837, %v835
    %v841 = vunpack.c.l.s4 1983009808
    %v842 = vunpack.c.0.s8 %v841
    %v843 = vlaneseq
    %v844 = vshrl.u32 %v843, 7
    %v845 = vsub.s32 %v842, %v844
    %v846 = vrot.slane %v598, %v845
    %847 = vrot.lane.b32.xlu0 %v846, 96
    %v848 = vpop.permute.xlu0 %847
    %vm850 = vcmask 943872
    %851 = vst.msk [vmem:[#allocation2 + $0x6] sm:$0x3] %vm850, %v848
    %v852 = vld [vmem:[#allocation2] sm:$0xff]
    %v854 = vcombine.high %v852, %v852
    %v856 = vunpack.c.l.s4 1983009808
    %v857 = vunpack.c.0.s8 %v856
    %v858 = vlaneseq
    %v859 = vshrl.u32 %v858, 7
    %v860 = vsub.s32 %v857, %v859
    %v861 = vrot.slane %v852, %v860
    %v863 = vunpack.c.l.s4 1983009808
    %v864 = vunpack.c.0.s8 %v863
    %v865 = vlaneseq
    %v866 = vshrl.u32 %v865, 7
    %v867 = vsub.s32 %v864, %v866
    %v868 = vrot.slane %v854, %v867
    %v869 = vcombine.high %v861, %v861
    %v870 = vcombine.high %v868, %v868
    %v875 = vpack.c.bf16 %v861, %v861
    %v876 = vpack.c.bf16 %v869, %v869
    %v877 = vpack.c.bf16 %v868, %v868
    %v878 = vpack.c.bf16 %v870, %v870
    %v879 = vld [vmem:[%s3] sm:$0xf]
    %v880 = vld [vmem:[%s3 + $0x4] sm:$0xf]
    %v881 = vld [vmem:[%s3 + $0x8] sm:$0xf]
    %v882 = vld [vmem:[%s3 + $0xc] sm:$0xf]
    %v883 = vld [vmem:[%s3 + $0x10] sm:$0xf]
    %v884 = vld [vmem:[%s3 + $0x14] sm:$0xf]
    %v885 = vld [vmem:[%s3 + $0x18] sm:$0xf]
    %v886 = vld [vmem:[%s3 + $0x1c] sm:$0xf]
    %v887 = vld [vmem:[%s3 + $0x20] sm:$0xf]
    %v888 = vld [vmem:[%s3 + $0x24] sm:$0xf]
    %v889 = vld [vmem:[%s3 + $0x28] sm:$0xf]
    %v890 = vld [vmem:[%s3 + $0x2c] sm:$0xf]
    %v891 = vld [vmem:[%s3 + $0x30] sm:$0xf]
    %v892 = vld [vmem:[%s3 + $0x34] sm:$0xf]
    %v893 = vld [vmem:[%s3 + $0x38] sm:$0xf]
    %v894 = vld [vmem:[%s3 + $0x3c] sm:$0xf]
    %v895 = vld [vmem:[%s3 + $0x40] sm:$0xf]
    %v896 = vld [vmem:[%s3 + $0x44] sm:$0xf]
    %v897 = vld [vmem:[%s3 + $0x48] sm:$0xf]
    %v898 = vld [vmem:[%s3 + $0x4c] sm:$0xf]
    %v899 = vld [vmem:[%s3 + $0x50] sm:$0xf]
    %v900 = vld [vmem:[%s3 + $0x54] sm:$0xf]
    %v901 = vld [vmem:[%s3 + $0x58] sm:$0xf]
    %v902 = vld [vmem:[%s3 + $0x5c] sm:$0xf]
    %v903 = vld [vmem:[%s3 + $0x60] sm:$0xf]
    %v904 = vld [vmem:[%s3 + $0x64] sm:$0xf]
    %v905 = vld [vmem:[%s3 + $0x68] sm:$0xf]
    %v906 = vld [vmem:[%s3 + $0x6c] sm:$0xf]
    %v907 = vld [vmem:[%s3 + $0x70] sm:$0xf]
    %v908 = vld [vmem:[%s3 + $0x74] sm:$0xf]
    %v909 = vld [vmem:[%s3 + $0x78] sm:$0xf]
    %v910 = vld [vmem:[%s3 + $0x7c] sm:$0xf]
    %v911 = vld [vmem:[%s3 + $0x80] sm:$0xf]
    %v912 = vld [vmem:[%s3 + $0x84] sm:$0xf]
    %v913 = vld [vmem:[%s3 + $0x88] sm:$0xf]
    %v914 = vld [vmem:[%s3 + $0x8c] sm:$0xf]
    %v915 = vld [vmem:[%s3 + $0x90] sm:$0xf]
    %v916 = vld [vmem:[%s3 + $0x94] sm:$0xf]
    %v917 = vld [vmem:[%s3 + $0x98] sm:$0xf]
    %v918 = vld [vmem:[%s3 + $0x9c] sm:$0xf]
    %v919 = vld [vmem:[%s3 + $0xa0] sm:$0xf]
    %v920 = vld [vmem:[%s3 + $0xa4] sm:$0xf]
    %v921 = vld [vmem:[%s3 + $0xa8] sm:$0xf]
    %v922 = vld [vmem:[%s3 + $0xac] sm:$0xf]
    %v923 = vld [vmem:[%s3 + $0xb0] sm:$0xf]
    %v924 = vld [vmem:[%s3 + $0xb4] sm:$0xf]
    %v925 = vld [vmem:[%s3 + $0xb8] sm:$0xf]
    %v926 = vld [vmem:[%s3 + $0xbc] sm:$0xf]
    %v927 = vld [vmem:[%s3 + $0xc0] sm:$0xf]
    %v928 = vld [vmem:[%s3 + $0xc4] sm:$0xf]
    %v929 = vld [vmem:[%s3 + $0xc8] sm:$0xf]
    %v930 = vld [vmem:[%s3 + $0xcc] sm:$0xf]
    %v931 = vld [vmem:[%s3 + $0xd0] sm:$0xf]
    %v932 = vld [vmem:[%s3 + $0xd4] sm:$0xf]
    %v933 = vld [vmem:[%s3 + $0xd8] sm:$0xf]
    %v934 = vld [vmem:[%s3 + $0xdc] sm:$0xf]
    %v935 = vld [vmem:[%s3 + $0xe0] sm:$0xf]
    %v936 = vld [vmem:[%s3 + $0xe4] sm:$0xf]
    %v937 = vld [vmem:[%s3 + $0xe8] sm:$0xf]
    %v938 = vld [vmem:[%s3 + $0xec] sm:$0xf]
    %v939 = vld [vmem:[%s3 + $0xf0] sm:$0xf]
    %v940 = vld [vmem:[%s3 + $0xf4] sm:$0xf]
    %v941 = vld [vmem:[%s3 + $0xf8] sm:$0x3]
    %v942 = vld [vmem:[%s4] sm:$0x1]
    %v944 = vlaneseq
    %v945 = vshrl.u32 %v944, 7
    %v946 = vsub.s32 0, %v945
    %v947 = vrot.slane %v942, %v946
    %v1012 = vunpack.c.l.b16 %v879
    %v1013 = vunpack.c.l.b16 %v880
    %v1014 = vunpack.c.l.b16 %v881
    %v1015 = vunpack.c.l.b16 %v882
    %v1016 = vunpack.c.l.b16 %v883
    %v1017 = vunpack.c.l.b16 %v884
    %v1018 = vunpack.c.l.b16 %v885
    %v1019 = vunpack.c.l.b16 %v886
    %v1020 = vunpack.c.l.b16 %v887
    %v1021 = vunpack.c.l.b16 %v888
    %v1022 = vunpack.c.l.b16 %v889
    %v1023 = vunpack.c.l.b16 %v890
    %v1024 = vunpack.c.l.b16 %v891
    %v1025 = vunpack.c.l.b16 %v892
    %v1026 = vunpack.c.l.b16 %v893
    %v1027 = vunpack.c.l.b16 %v894
    %v1028 = vunpack.c.l.b16 %v895
    %v1029 = vunpack.c.l.b16 %v896
    %v1030 = vunpack.c.l.b16 %v897
    %v1031 = vunpack.c.l.b16 %v898
    %v1032 = vunpack.c.l.b16 %v899
    %v1033 = vunpack.c.l.b16 %v900
    %v1034 = vunpack.c.l.b16 %v901
    %v1035 = vunpack.c.l.b16 %v902
    %v1036 = vunpack.c.l.b16 %v903
    %v1037 = vunpack.c.l.b16 %v904
    %v1038 = vunpack.c.l.b16 %v905
    %v1039 = vunpack.c.l.b16 %v906
    %v1040 = vunpack.c.l.b16 %v907
    %v1041 = vunpack.c.l.b16 %v908
    %v1042 = vunpack.c.l.b16 %v909
    %v1043 = vunpack.c.l.b16 %v910
    %v1044 = vunpack.c.l.b16 %v911
    %v1045 = vunpack.c.l.b16 %v912
    %v1046 = vunpack.c.l.b16 %v913
    %v1047 = vunpack.c.l.b16 %v914
    %v1048 = vunpack.c.l.b16 %v915
    %v1049 = vunpack.c.l.b16 %v916
    %v1050 = vunpack.c.l.b16 %v917
    %v1051 = vunpack.c.l.b16 %v918
    %v1052 = vunpack.c.l.b16 %v919
    %v1053 = vunpack.c.l.b16 %v920
    %v1054 = vunpack.c.l.b16 %v921
    %v1055 = vunpack.c.l.b16 %v922
    %v1056 = vunpack.c.l.b16 %v923
    %v1057 = vunpack.c.l.b16 %v924
    %v1058 = vunpack.c.l.b16 %v925
    %v1059 = vunpack.c.l.b16 %v926
    %v1060 = vunpack.c.l.b16 %v927
    %v1061 = vunpack.c.l.b16 %v928
    %v1062 = vunpack.c.l.b16 %v929
    %v1063 = vunpack.c.l.b16 %v930
    %v1064 = vunpack.c.l.b16 %v931
    %v1065 = vunpack.c.l.b16 %v932
    %v1066 = vunpack.c.l.b16 %v933
    %v1067 = vunpack.c.l.b16 %v934
    %v1068 = vunpack.c.l.b16 %v935
    %v1069 = vunpack.c.l.b16 %v936
    %v1070 = vunpack.c.l.b16 %v937
    %v1071 = vunpack.c.l.b16 %v938
    %v1072 = vunpack.c.l.b16 %v939
    %v1073 = vunpack.c.l.b16 %v940
    %v1074 = vunpack.c.l.b16 %v941
    %v1075 = vpack.c.b16 %v1013, %v1012
    %v1076 = vpack.c.b16 %v1015, %v1014
    %v1077 = vpack.c.b16 %v1017, %v1016
    %v1078 = vpack.c.b16 %v1019, %v1018
    %v1079 = vpack.c.b16 %v1021, %v1020
    %v1080 = vpack.c.b16 %v1023, %v1022
    %v1081 = vpack.c.b16 %v1025, %v1024
    %v1082 = vpack.c.b16 %v1027, %v1026
    %v1083 = vpack.c.b16 %v1029, %v1028
    %v1084 = vpack.c.b16 %v1031, %v1030
    %v1085 = vpack.c.b16 %v1033, %v1032
    %v1086 = vpack.c.b16 %v1035, %v1034
    %v1087 = vpack.c.b16 %v1037, %v1036
    %v1088 = vpack.c.b16 %v1039, %v1038
    %v1089 = vpack.c.b16 %v1041, %v1040
    %v1090 = vpack.c.b16 %v1043, %v1042
    %v1091 = vpack.c.b16 %v1045, %v1044
    %v1092 = vpack.c.b16 %v1047, %v1046
    %v1093 = vpack.c.b16 %v1049, %v1048
    %v1094 = vpack.c.b16 %v1051, %v1050
    %v1095 = vpack.c.b16 %v1053, %v1052
    %v1096 = vpack.c.b16 %v1055, %v1054
    %v1097 = vpack.c.b16 %v1057, %v1056
    %v1098 = vpack.c.b16 %v1059, %v1058
    %v1099 = vpack.c.b16 %v1061, %v1060
    %v1100 = vpack.c.b16 %v1063, %v1062
    %v1101 = vpack.c.b16 %v1065, %v1064
    %v1102 = vpack.c.b16 %v1067, %v1066
    %v1103 = vpack.c.b16 %v1069, %v1068
    %v1104 = vpack.c.b16 %v1071, %v1070
    %v1105 = vpack.c.b16 %v1073, %v1072
    %v1106 = vpack.c.b16 %v1074, %v1074
    %vm1138 = vcmask 949248
    %v1140 = vsel %vm1138, %v878, 0
    %vm1142 = vcmask 1041408
    %v1144 = vsel %vm1142, %v1106, 0
    %1146 = vmatprep.subr.bf16.mxu0 0
    %1147 = vmatpush1.bf16.msra.mxu0 %v1075
    %1148 = vmatprep.subr.bf16.mxu0 0
    %1149 = vmatpush1.bf16.msra.mxu0 %v1076
    %1150 = vmatprep.subr.bf16.mxu0 0
    %1151 = vmatpush1.bf16.msra.mxu0 %v1077
    %1152 = vmatprep.subr.bf16.mxu0 0
    %1153 = vmatpush1.bf16.msra.mxu0 %v1078
    %1154 = vmatprep.subr.bf16.mxu0 0
    %1155 = vmatpush1.bf16.msra.mxu0 %v1079
    %1156 = vmatprep.subr.bf16.mxu0 0
    %1157 = vmatpush1.bf16.msra.mxu0 %v1080
    %1158 = vmatprep.subr.bf16.mxu0 0
    %1159 = vmatpush1.bf16.msra.mxu0 %v1081
    %1160 = vmatprep.subr.bf16.mxu0 0
    %1161 = vmatpush1.bf16.msra.mxu0 %v1082
    %1162 = vmatprep.subr.bf16.mxu0 0
    %1163 = vmatpush1.bf16.msra.mxu0 %v1083
    %1164 = vmatprep.subr.bf16.mxu0 0
    %1165 = vmatpush1.bf16.msra.mxu0 %v1084
    %1166 = vmatprep.subr.bf16.mxu0 0
    %1167 = vmatpush1.bf16.msra.mxu0 %v1085
    %1168 = vmatprep.subr.bf16.mxu0 0
    %1169 = vmatpush1.bf16.msra.mxu0 %v1086
    %1170 = vmatprep.subr.bf16.mxu0 0
    %1171 = vmatpush1.bf16.msra.mxu0 %v1087
    %1172 = vmatprep.subr.bf16.mxu0 0
    %1173 = vmatpush1.bf16.msra.mxu0 %v1088
    %1174 = vmatprep.subr.bf16.mxu0 0
    %1175 = vmatpush1.bf16.msra.mxu0 %v1089
    %1176 = vmatprep.subr.bf16.mxu0 0
    %1177 = vmatpush1.bf16.msra.mxu0 %v1090
    %1178 = vmatprep.mubr.bf16.mxu0 %v876
    %1179 = vmatmul.mubr.bf16.gmra.mrb[0].mxu0 %v875
    %v1180 = vpop.f32.mrb[0].mxu0
    %v1181 = vadd.f32 %v947, %v1180
    %v1182 = vpop.f32.mrb[0].mxu0
    %v1183 = vpop.f32.mrb[0].mxu0
    %v1184 = vpop.f32.mrb[0].mxu0
    %1185 = vdwg.mxu0
    %1186 = vmatprep.subr.bf16.mxu0 0
    %1187 = vmatpush1.bf16.msra.mxu0 %v1091
    %1188 = vmatprep.subr.bf16.mxu0 0
    %1189 = vmatpush1.bf16.msra.mxu0 %v1092
    %1190 = vmatprep.subr.bf16.mxu0 0
    %1191 = vmatpush1.bf16.msra.mxu0 %v1093
    %1192 = vmatprep.subr.bf16.mxu0 0
    %1193 = vmatpush1.bf16.msra.mxu0 %v1094
    %1194 = vmatprep.subr.bf16.mxu0 0
    %1195 = vmatpush1.bf16.msra.mxu0 %v1095
    %1196 = vmatprep.subr.bf16.mxu0 0
    %1197 = vmatpush1.bf16.msra.mxu0 %v1096
    %1198 = vmatprep.subr.bf16.mxu0 0
    %1199 = vmatpush1.bf16.msra.mxu0 %v1097
    %1200 = vmatprep.subr.bf16.mxu0 0
    %1201 = vmatpush1.bf16.msra.mxu0 %v1098
    %1202 = vmatprep.subr.bf16.mxu0 0
    %1203 = vmatpush1.bf16.msra.mxu0 %v1099
    %1204 = vmatprep.subr.bf16.mxu0 0
    %1205 = vmatpush1.bf16.msra.mxu0 %v1100
    %1206 = vmatprep.subr.bf16.mxu0 0
    %1207 = vmatpush1.bf16.msra.mxu0 %v1101
    %1208 = vmatprep.subr.bf16.mxu0 0
    %1209 = vmatpush1.bf16.msra.mxu0 %v1102
    %1210 = vmatprep.subr.bf16.mxu0 0
    %1211 = vmatpush1.bf16.msra.mxu0 %v1103
    %1212 = vmatprep.subr.bf16.mxu0 0
    %1213 = vmatpush1.bf16.msra.mxu0 %v1104
    %1214 = vmatprep.subr.bf16.mxu0 0
    %1215 = vmatpush1.bf16.msra.mxu0 %v1105
    %1216 = vmatprep.subr.bf16.mxu0 0
    %1217 = vmatpush1.bf16.msra.mxu0 %v1144
    %1218 = vmatprep.mubr.bf16.mxu0 %v1140
    %1219 = vmatmul.mubr.bf16.gmra.mrb[0].mxu0 %v877
    %v1220 = vpop.f32.mrb[0].mxu0
    %v1221 = vadd.f32 %v1181, %v1220
    %v1222 = vpop.f32.mrb[0].mxu0
    %v1223 = vpop.f32.mrb[0].mxu0
    %v1224 = vpop.f32.mrb[0].mxu0
    %1225 = vdwg.mxu0
    %v1226 = vmax.f32 %v1221, 0.0
    %v1227 = vpack.c.bf16 %v1226, %v1226
    %v1228 = vld [vmem:[%s5] sm:$0xf]
    %v1229 = vld [vmem:[%s5 + $0x4] sm:$0xf]
    %v1230 = vld [vmem:[%s5 + $0x8] sm:$0xf]
    %v1231 = vld [vmem:[%s5 + $0xc] sm:$0xf]
    %v1232 = vld [vmem:[%s5 + $0x10] sm:$0xf]
    %v1233 = vld [vmem:[%s6] sm:$0x1]
    %v1235 = vlaneseq
    %v1236 = vshrl.u32 %v1235, 7
    %v1237 = vsub.s32 0, %v1236
    %v1238 = vrot.slane %v1233, %v1237
    %v1245 = vunpack.c.l.b16 %v1228
    %v1246 = vunpack.c.l.b16 %v1229
    %v1247 = vunpack.c.l.b16 %v1230
    %v1248 = vunpack.c.l.b16 %v1231
    %v1249 = vunpack.c.l.b16 %v1232
    %v1250 = vpack.c.b16 %v1246, %v1245
    %v1251 = vpack.c.b16 %v1248, %v1247
    %v1252 = vpack.c.b16 %v1249, %v1249
    %vm1255 = vcmask 326656
    %v1257 = vsel %vm1255, %v1227, 0
    %v1260 = vsel %vm550, %v1252, 0
    %1262 = vmatprep.subr.bf16.mxu0 0
    %1263 = vmatpush1.bf16.msra.mxu0 %v1250
    %1264 = vmatprep.subr.bf16.mxu0 0
    %1265 = vmatpush1.bf16.msra.mxu0 %v1251
    %1266 = vmatprep.subr.bf16.mxu0 0
    %1267 = vmatpush1.bf16.msra.mxu0 %v1260
    %1268 = vmatprep.subr.bf16.mxu0 0
    %1269 = vmatpush1.bf16.msra.mxu0 0
    %1270 = vmatprep.subr.bf16.mxu0 0
    %1271 = vmatpush1.bf16.msra.mxu0 0
    %1272 = vmatprep.subr.bf16.mxu0 0
    %1273 = vmatpush1.bf16.msra.mxu0 0
    %1274 = vmatprep.subr.bf16.mxu0 0
    %1275 = vmatpush1.bf16.msra.mxu0 0
    %1276 = vmatprep.subr.bf16.mxu0 0
    %1277 = vmatpush1.bf16.msra.mxu0 0
    %1278 = vmatprep.subr.bf16.mxu0 0
    %1279 = vmatpush1.bf16.msra.mxu0 0
    %1280 = vmatprep.subr.bf16.mxu0 0
    %1281 = vmatpush1.bf16.msra.mxu0 0
    %1282 = vmatprep.subr.bf16.mxu0 0
    %1283 = vmatpush1.bf16.msra.mxu0 0
    %1284 = vmatprep.subr.bf16.mxu0 0
    %1285 = vmatpush1.bf16.msra.mxu0 0
    %1286 = vmatprep.subr.bf16.mxu0 0
    %1287 = vmatpush1.bf16.msra.mxu0 0
    %1288 = vmatprep.subr.bf16.mxu0 0
    %1289 = vmatpush1.bf16.msra.mxu0 0
    %1290 = vmatprep.subr.bf16.mxu0 0
    %1291 = vmatpush1.bf16.msra.mxu0 0
    %1292 = vmatprep.subr.bf16.mxu0 0
    %1293 = vmatpush1.bf16.msra.mxu0 0
    %1294 = vmatprep.mubr.bf16.mxu0 0
    %1295 = vmatmul.mubr.bf16.gmra.mrb[0].mxu0 %v1257
    %v1296 = vpop.f32.mrb[0].mxu0
    %v1297 = vadd.f32 %v1238, %v1296
    %v1298 = vpop.f32.mrb[0].mxu0
    %v1299 = vpop.f32.mrb[0].mxu0
    %v1300 = vpop.f32.mrb[0].mxu0
    %1301 = vdwg.mxu0
    %vm1302 = vcmask 74752
    %v1303 = vsel %vm1302, %v1297, -inf
    %1304 = vmax.xlane.f32.xlu0 %v1303
    %v1305 = vpop.xlane.xlu0 %1304
    %v1306 = vsub.f32 %v1297, %v1305
    %v1307 = vmul.f32 %v1306, 1.442695
    %v1308 = vpow.pop %v1307
    %v1309 = vsel %vm1302, %v1308, 0.0
    %1310 = vadd.xlane.f32.xlu0 %v1309
    %v1311 = vpop.xlane.xlu0 %1310
    %v1312 = vlog2.pop %v1311
    %v1313 = vmul.f32 %v1312, 0.6931472
    %v1314 = vsub.f32 %v1306, %v1313
    %1315 = vst.msk [vmem:[#allocation3] sm:$0x3] %vm1302, %v1314
    // Predicated region
    $region30: #{net_forward.3} parent=1 // pred_check
      _
    $region31: #{net_forward.3} parent=1 // pred_check_branch
      %1317 = sbr.rel (0) target = $region33
    $region32: #{net_forward.3} parent=1 // pred_region
      %s1319 = ssub.s32 32, 32
      %1320 = vsyncadd [#allocation4], %s1319
      %s1322 = sshll.u32 [#allocation3], 4
      %s1323 = int_to_ptr.vmem [resolvable:$true] %s1322
      %1325 = dma.vmem_to_hbm [thread:$0]  %s1323, 32, %s7, [#allocation4]
    $region33: #{net_forward.3} parent=1 // pred_fallthru
      _
    // Predicated region
    $region34: #{net_forward.3} parent=1 // pred_check
      _
    $region35: #{net_forward.3} parent=1 // pred_check_branch
      %1327 = sbr.rel (0) target = $region37
    $region36: #{net_forward.3} parent=1 // pred_region
      %1328 = dma.done [#allocation4], 32
    $region37: #{net_forward.3} parent=1 // pred_fallthru
      _
    %1329 = vsyncpa [#allocation4], 1

</llo_original>
